<compile_context>
chip_gen: v7x
topology: tpu7x:2x2x1
jax: 0.10.0
libtpu: 0.0.40
codegen_flags: <defaults>
</compile_context>

<pallas_src>
import math

import jax
import jax.numpy as jnp
import numpy as np
from jax.experimental import pallas as pl
from jax.experimental.pallas import tpu as pltpu


def _tpu_vmem_capacity_bytes():
    """Physical VMEM per core; conservative (v7x-sized) fallback if unknown."""
    get_info = getattr(pltpu, "get_tpu_info", None)
    if get_info is not None:
        try:
            cap = int(get_info().vmem_capacity_bytes)
            if cap > 0:
                return cap
        except Exception:  # hardware-info probe only; never masks kernel errors
            pass
    return 64 << 20


def _per_step_vmem_bytes(tile_ho, Wo, C, out_itemsize, compute_itemsize,
                         single_buffer_consts):
    """Explicit per-grid-step VMEM accounting (pipeline buffers + scratch)."""
    M = tile_ho * Wo
    row_block = tile_ho * (Wo + 1) * 2 * C * compute_itemsize   # even- or odd-row block
    halo_block = (Wo + 1) * 2 * C * compute_itemsize            # 1-row halo block
    in_bytes = 2 * (2 * row_block + halo_block)                 # 2x pipeline buffers
    const_bufs = 1 if single_buffer_consts else 2
    const_bytes = const_bufs * (9 * C * C * compute_itemsize + C * 4)
    out_bytes = 2 * M * C * out_itemsize                        # 2x pipeline buffers
    slab_bytes = M * 9 * C * compute_itemsize                   # im2col scratch
    acc_bytes = M * C * 4                                       # f32 matmul result
    return in_bytes + const_bytes + out_bytes + slab_bytes + acc_bytes


def _auto_tile_ho(N, Ho, Wo, C, out_itemsize, compute_itemsize, budget,
                  single_buffer_consts):
    """Largest row tile fitting the VMEM budget, targeting ~1024 MXU rows per
    fused matmul, then reduced so both v7x TensorCores see >= 4 grid steps."""
    target_m = 1024
    tile = 1
    for th in range(1, Ho + 1):
        if th > 1:
            if th * Wo > target_m:
                break
            if _per_step_vmem_bytes(th, Wo, C, out_itemsize, compute_itemsize,
                                    single_buffer_consts) > budget:
                break
        tile = th
    min_steps = 4                      # keep both v7x TensorCores busy
    if Ho > 1 and N * pl.cdiv(Ho, tile) < min_steps:
        want_tiles = pl.cdiv(min_steps, N)
        tile = min(tile, max(1, pl.cdiv(Ho, want_tiles)))
    return tile


def _make_kernel(tile_ho, Wo, C):
    """Per-(batch, row-tile) conv step: write the im2col slab into VMEM scratch,
    then one fused (tile_ho*Wo, 9C) x (9C, C) MXU matmul."""
    M = tile_ho * Wo

    def kernel(x_even_ref, x_odd_ref, x_halo_ref, w_ref, b_ref, o_ref, slab_ref):
        # x_even_ref: (1, tile_ho, Wo+1, 2C)  padded rows 2*(j*tile_ho + r)      (even)
        # x_odd_ref : (1, tile_ho, Wo+1, 2C)  padded rows 2*(j*tile_ho + r) + 1  (odd)
        # x_halo_ref: (1, 1,       Wo+1, 2C)  padded row  2*(j+1)*tile_ho        (halo, even)
        # Lane dim packs column parity: lanes [0:C] = even padded cols, [C:2C] = odd.
        # w_ref: (9C, C) rows ordered (kh, kw, cin).  b_ref: (1, C) float32.
        # o_ref: (1, tile_ho, Wo, C).  slab_ref: (tile_ho, Wo, 9C) VMEM scratch.
        for kh in range(3):
            for kw in range(3):
                t = kh * 3 + kw
                cols = slice(kw // 2, kw // 2 + Wo)              # padded col 2*wo+kw
                lanes = slice((kw % 2) * C, (kw % 2) * C + C)    # column parity
                dst = slice(t * C, (t + 1) * C)
                if kh == 0:
                    slab_ref[:, :, dst] = x_even_ref[0, :, cols, lanes]
                elif kh == 1:
                    slab_ref[:, :, dst] = x_odd_ref[0, :, cols, lanes]
                else:
                    # kh == 2: even rows shifted down by one; last row is the halo.
                    if tile_ho > 1:
                        slab_ref[:tile_ho - 1, :, dst] = (
                            x_even_ref[0, 1:tile_ho, cols, lanes])
                    slab_ref[tile_ho - 1, :, dst] = x_halo_ref[0, 0, cols, lanes]

        slab = slab_ref[...].reshape(M, 9 * C)
        prec = jax.lax.Precision.HIGHEST if slab.dtype == jnp.float32 else None
        acc = jnp.dot(slab, w_ref[...], precision=prec,
                      preferred_element_type=jnp.float32)
        acc = acc + b_ref[...]                                   # (1, C) f32 broadcast
        o_ref[0] = acc.reshape(tile_ho, Wo, C).astype(o_ref.dtype)

    return kernel


def downsample(x_nchw, weight_oihw, bias, *, tile_ho=None, compute_dtype=None,
               single_buffer_consts=None):
    """Pallas equivalent of nn.Conv2d(dim, dim, 3, stride=2, padding=1)(x_nchw)."""
    N, C, H, W = x_nchw.shape
    assert weight_oihw.shape == (C, C, 3, 3) and bias.shape == (C,)
    Ho = (H - 1) // 2 + 1
    Wo = (W - 1) // 2 + 1

    out_dtype = x_nchw.dtype
    cdt = jnp.dtype(out_dtype if compute_dtype is None else compute_dtype)
    c_item = cdt.itemsize
    o_item = jnp.dtype(out_dtype).itemsize

    # Generation-aware VMEM budget: ~3/4 of physical (v7x: 48 MiB, v5e/v6e: 96 MiB).
    vmem_cap = _tpu_vmem_capacity_bytes()
    budget_cap = (vmem_cap * 3) // 4
    sel_budget = max(budget_cap - (8 << 20), 16 << 20)

    if single_buffer_consts is None:
        # Single-buffer the grid-constant weights only when they are big enough to
        # matter.  NOTE: pass single_buffer_consts=False on Pallas builds that
        # reject pipeline_mode=pl.Buffered(1).
        single_buffer_consts = bool(hasattr(pl, "Buffered")
                                    and 9 * C * C * c_item >= (1 << 20))

    if tile_ho is None:
        tile_ho = _auto_tile_ho(N, Ho, Wo, C, o_item, c_item, sel_budget,
                                single_buffer_consts)
    tile_ho = int(max(1, min(tile_ho, Ho)))
    n_tiles = pl.cdiv(Ho, tile_ho)
    HoP = n_tiles * tile_ho          # padded output rows (extras sliced off below)
    HrP = HoP + 1                    # even-row planes carry a +1 halo row per tile
    Hp = 2 * HrP
    Wp = 2 * (Wo + 1)

    # ---- glue: channel-last + zero pad (what any channel-last conv needs), then
    # a FREE reshape that exposes row parity to the BlockSpec and folds column
    # parity into the lane dim (no extra HBM pass, no parity transpose).
    # TODO(synk): fuse the zero-pad and the NCHW<->NHWC transposes into the kernel
    # (or keep the surrounding model NHWC) to drop the ~2 extra HBM round trips.
    x_nhwc = jnp.transpose(x_nchw, (0, 2, 3, 1)).astype(cdt)
    x_pad = jnp.pad(x_nhwc, ((0, 0), (1, Hp - H - 1), (1, Wp - W - 1), (0, 0)))
    xr = x_pad.reshape(N, HrP, 2, Wo + 1, 2 * C)

    # (O,I,3,3) -> (kh,kw,cin,cout) -> (9*C, C); row order matches the slab lanes.
    w2 = jnp.transpose(weight_oihw, (2, 3, 1, 0)).reshape(9 * C, C).astype(cdt)
    b2 = bias.reshape(1, C).astype(jnp.float32)

    kernel = _make_kernel(tile_ho, Wo, C)

    x_even_spec = pl.BlockSpec((1, tile_ho, None, Wo + 1, 2 * C),
                               lambda n, j: (n, j, 0, 0, 0))
    x_odd_spec = pl.BlockSpec((1, tile_ho, None, Wo + 1, 2 * C),
                              lambda n, j: (n, j, 1, 0, 0))
    x_halo_spec = pl.BlockSpec((1, 1, None, Wo + 1, 2 * C),
                               lambda n, j: (n, (j + 1) * tile_ho, 0, 0, 0))
    const_kw = {"pipeline_mode": pl.Buffered(1)} if single_buffer_consts else {}
    w_spec = pl.BlockSpec((9 * C, C), lambda n, j: (0, 0), **const_kw)
    b_spec = pl.BlockSpec((1, C), lambda n, j: (0, 0), **const_kw)
    out_spec = pl.BlockSpec((1, tile_ho, Wo, C), lambda n, j: (n, j, 0, 0))

    step_bytes = _per_step_vmem_bytes(tile_ho, Wo, C, o_item, c_item,
                                      single_buffer_consts)
    vmem_limit = min(budget_cap,
                     max(32 << 20, step_bytes + step_bytes // 4 + (4 << 20)))
    vmem_limit = int(min(max(vmem_limit, step_bytes + (2 << 20)),
                         vmem_cap - (4 << 20)))

    flops = 2 * N * HoP * Wo * 9 * C * C
    bytes_accessed = int(xr.size * c_item + w2.size * c_item + b2.size * 4
                         + N * HoP * Wo * C * o_item)
    cost = pl.CostEstimate(flops=flops, transcendentals=0,
                           bytes_accessed=bytes_accessed)

    out4 = pl.pallas_call(
        kernel,
        out_shape=jax.ShapeDtypeStruct((N, HoP, Wo, C), out_dtype),
        grid=(N, n_tiles),
        in_specs=[x_even_spec, x_odd_spec, x_halo_spec, w_spec, b_spec],
        out_specs=out_spec,
        scratch_shapes=[pltpu.VMEM((tile_ho, Wo, 9 * C), cdt)],
        compiler_params=pltpu.CompilerParams(
            dimension_semantics=("parallel", "parallel"),
            vmem_limit_bytes=vmem_limit,
        ),
        cost_estimate=cost,
    )(xr, xr, xr, w2, b2)

    # ---- glue: back to NCHW (drop padded output rows, if any).
    return jnp.transpose(out4[:, :Ho], (0, 3, 1, 2))


if __name__ == "__main__":
    # Small shapes consistent with the module's forward: NCHW input.
    N, dim, H, W = 2, 4, 16, 16

    key = jax.random.PRNGKey(0)
    k_w, k_b, k_x = jax.random.split(key, 3)

    # Deterministic Conv2d-style init (kaiming-uniform-ish bounds).
    fan_in = dim * 3 * 3
    bound = 1.0 / math.sqrt(fan_in)
    weight = jax.random.uniform(k_w, (dim, dim, 3, 3), jnp.float32, -bound, bound)  # OIHW
    bias = jax.random.uniform(k_b, (dim,), jnp.float32, -bound, bound)
    x = jax.random.normal(k_x, (N, dim, H, W), jnp.float32)

    ref = jax.lax.conv_general_dilated(
        x, weight, window_strides=(2, 2), padding=((1, 1), (1, 1)),
        dimension_numbers=("NCHW", "OIHW", "NCHW"),
        precision=jax.lax.Precision.HIGHEST,
    ) + bias.reshape(1, -1, 1, 1)

    # Tolerance is loose enough for MXU multi-pass f32 rounding differences while
    # still far below any structural (tap/weight-ordering) error.
    tol = dict(rtol=5e-3, atol=5e-3)

    # Auto-tiled run (picks tile_ho=4 here -> grid (2, 2), exercises the halo path).
    out = jax.block_until_ready(downsample(x, weight, bias))
    assert out.shape == (N, dim, (H + 1) // 2, (W + 1) // 2)
    np.testing.assert_allclose(np.asarray(out), np.asarray(ref), **tol)

    # Uneven row tiling (tile_ho=3 -> HoP=9 > Ho=8): padded output rows sliced off.
    out3 = jax.block_until_ready(downsample(x, weight, bias, tile_ho=3))
    np.testing.assert_allclose(np.asarray(out3), np.asarray(ref), **tol)

    print("KERNEL_OK")
</pallas_src>

<mosaic_0001>
module attributes {stable_mosaic.version = 11 : i64} {
  func.func @kernel(%arg0: i32, %arg1: i32, %arg2: memref<1x4x1x9x8xf32, #tpu.memory_space<vmem>>, %arg3: memref<1x4x1x9x8xf32, #tpu.memory_space<vmem>>, %arg4: memref<1x1x1x9x8xf32, #tpu.memory_space<vmem>>, %arg5: memref<36x4xf32, #tpu.memory_space<vmem>>, %arg6: memref<1x4xf32, #tpu.memory_space<vmem>>, %arg7: memref<1x4x8x4xf32, #tpu.memory_space<vmem>>, %arg8: memref<4x8x36xf32, #tpu.memory_space<vmem>>) attributes {dimension_semantics = [#tpu.dimension_semantics<parallel>, #tpu.dimension_semantics<parallel>], iteration_bounds = array<i64: 2, 2>, scalar_prefetch = 0 : i64, scratch_operands = 1 : i64, tpu.core_type = #tpu.core_type<tc>, window_params = [{transform_indices = @transform_0, window_bounds = array<i64: 1, 4, 1, 9, 8>}, {transform_indices = @transform_1, window_bounds = array<i64: 1, 4, 1, 9, 8>}, {transform_indices = @transform_2, window_bounds = array<i64: 1, 1, 1, 9, 8>}, {pipeline_mode = #tpu.pipeline_mode<synchronous>, transform_indices = @transform_3, window_bounds = array<i64: 36, 4>}, {pipeline_mode = #tpu.pipeline_mode<synchronous>, transform_indices = @transform_4, window_bounds = array<i64: 1, 4>}, {transform_indices = @transform_5, window_bounds = array<i64: 1, 4, 8, 4>}]} {
    %c0 = arith.constant 0 : index
    %c0_0 = arith.constant 0 : index
    %c0_1 = arith.constant 0 : index
    %c0_2 = arith.constant 0 : index
    %c0_3 = arith.constant 0 : index
    %0 = vector.load %arg2[%c0, %c0_0, %c0_1, %c0_2, %c0_3] : memref<1x4x1x9x8xf32, #tpu.memory_space<vmem>>, vector<1x4x1x8x4xf32>
    %1 = vector.shape_cast %0 : vector<1x4x1x8x4xf32> to vector<4x8x4xf32>
    %c0_4 = arith.constant 0 : index
    %c0_5 = arith.constant 0 : index
    %c0_6 = arith.constant 0 : index
    %2 = vector.load %arg8[%c0_4, %c0_5, %c0_6] : memref<4x8x36xf32, #tpu.memory_space<vmem>>, vector<4x8x4xf32>
    tpu.vector_store %arg8[%c0_4, %c0_5, %c0_6], %1 {strides = array<i32>} : memref<4x8x36xf32, #tpu.memory_space<vmem>>, vector<4x8x4xf32>,
    %c0_7 = arith.constant 0 : index
    %c0_8 = arith.constant 0 : index
    %c0_9 = arith.constant 0 : index
    %c0_10 = arith.constant 0 : index
    %c4 = arith.constant 4 : index
    %3 = vector.load %arg2[%c0_7, %c0_8, %c0_9, %c0_10, %c4] : memref<1x4x1x9x8xf32, #tpu.memory_space<vmem>>, vector<1x4x1x8x4xf32>
    %4 = vector.shape_cast %3 : vector<1x4x1x8x4xf32> to vector<4x8x4xf32>
    %c0_11 = arith.constant 0 : index
    %c0_12 = arith.constant 0 : index
    %c4_13 = arith.constant 4 : index
    %5 = vector.load %arg8[%c0_11, %c0_12, %c4_13] : memref<4x8x36xf32, #tpu.memory_space<vmem>>, vector<4x8x4xf32>
    tpu.vector_store %arg8[%c0_11, %c0_12, %c4_13], %4 {strides = array<i32>} : memref<4x8x36xf32, #tpu.memory_space<vmem>>, vector<4x8x4xf32>,
    %c0_14 = arith.constant 0 : index
    %c0_15 = arith.constant 0 : index
    %c0_16 = arith.constant 0 : index
    %c1 = arith.constant 1 : index
    %c0_17 = arith.constant 0 : index
    %6 = vector.load %arg2[%c0_14, %c0_15, %c0_16, %c1, %c0_17] : memref<1x4x1x9x8xf32, #tpu.memory_space<vmem>>, vector<1x4x1x8x4xf32>
    %7 = vector.shape_cast %6 : vector<1x4x1x8x4xf32> to vector<4x8x4xf32>
    %c0_18 = arith.constant 0 : index
    %c0_19 = arith.constant 0 : index
    %c8 = arith.constant 8 : index
    %8 = vector.load %arg8[%c0_18, %c0_19, %c8] : memref<4x8x36xf32, #tpu.memory_space<vmem>>, vector<4x8x4xf32>
    tpu.vector_store %arg8[%c0_18, %c0_19, %c8], %7 {strides = array<i32>} : memref<4x8x36xf32, #tpu.memory_space<vmem>>, vector<4x8x4xf32>,
    %c0_20 = arith.constant 0 : index
    %c0_21 = arith.constant 0 : index
    %c0_22 = arith.constant 0 : index
    %c0_23 = arith.constant 0 : index
    %c0_24 = arith.constant 0 : index
    %9 = vector.load %arg3[%c0_20, %c0_21, %c0_22, %c0_23, %c0_24] : memref<1x4x1x9x8xf32, #tpu.memory_space<vmem>>, vector<1x4x1x8x4xf32>
    %10 = vector.shape_cast %9 : vector<1x4x1x8x4xf32> to vector<4x8x4xf32>
    %c0_25 = arith.constant 0 : index
    %c0_26 = arith.constant 0 : index
    %c12 = arith.constant 12 : index
    %11 = vector.load %arg8[%c0_25, %c0_26, %c12] : memref<4x8x36xf32, #tpu.memory_space<vmem>>, vector<4x8x4xf32>
    tpu.vector_store %arg8[%c0_25, %c0_26, %c12], %10 {strides = array<i32>} : memref<4x8x36xf32, #tpu.memory_space<vmem>>, vector<4x8x4xf32>,
    %c0_27 = arith.constant 0 : index
    %c0_28 = arith.constant 0 : index
    %c0_29 = arith.constant 0 : index
    %c0_30 = arith.constant 0 : index
    %c4_31 = arith.constant 4 : index
    %12 = vector.load %arg3[%c0_27, %c0_28, %c0_29, %c0_30, %c4_31] : memref<1x4x1x9x8xf32, #tpu.memory_space<vmem>>, vector<1x4x1x8x4xf32>
    %13 = vector.shape_cast %12 : vector<1x4x1x8x4xf32> to vector<4x8x4xf32>
    %c0_32 = arith.constant 0 : index
    %c0_33 = arith.constant 0 : index
    %c16 = arith.constant 16 : index
    %14 = vector.load %arg8[%c0_32, %c0_33, %c16] : memref<4x8x36xf32, #tpu.memory_space<vmem>>, vector<4x8x4xf32>
    tpu.vector_store %arg8[%c0_32, %c0_33, %c16], %13 {strides = array<i32>} : memref<4x8x36xf32, #tpu.memory_space<vmem>>, vector<4x8x4xf32>,
    %c0_34 = arith.constant 0 : index
    %c0_35 = arith.constant 0 : index
    %c0_36 = arith.constant 0 : index
    %c1_37 = arith.constant 1 : index
    %c0_38 = arith.constant 0 : index
    %15 = vector.load %arg3[%c0_34, %c0_35, %c0_36, %c1_37, %c0_38] : memref<1x4x1x9x8xf32, #tpu.memory_space<vmem>>, vector<1x4x1x8x4xf32>
    %16 = vector.shape_cast %15 : vector<1x4x1x8x4xf32> to vector<4x8x4xf32>
    %c0_39 = arith.constant 0 : index
    %c0_40 = arith.constant 0 : index
    %c20 = arith.constant 20 : index
    %17 = vector.load %arg8[%c0_39, %c0_40, %c20] : memref<4x8x36xf32, #tpu.memory_space<vmem>>, vector<4x8x4xf32>
    tpu.vector_store %arg8[%c0_39, %c0_40, %c20], %16 {strides = array<i32>} : memref<4x8x36xf32, #tpu.memory_space<vmem>>, vector<4x8x4xf32>,
    %c0_41 = arith.constant 0 : index
    %c1_42 = arith.constant 1 : index
    %c0_43 = arith.constant 0 : index
    %c0_44 = arith.constant 0 : index
    %c0_45 = arith.constant 0 : index
    %18 = vector.load %arg2[%c0_41, %c1_42, %c0_43, %c0_44, %c0_45] : memref<1x4x1x9x8xf32, #tpu.memory_space<vmem>>, vector<1x3x1x8x4xf32>
    %19 = vector.shape_cast %18 : vector<1x3x1x8x4xf32> to vector<3x8x4xf32>
    %c0_46 = arith.constant 0 : index
    %c0_47 = arith.constant 0 : index
    %c24 = arith.constant 24 : index
    %20 = vector.load %arg8[%c0_46, %c0_47, %c24] : memref<4x8x36xf32, #tpu.memory_space<vmem>>, vector<3x8x4xf32>
    tpu.vector_store %arg8[%c0_46, %c0_47, %c24], %19 {strides = array<i32>} : memref<4x8x36xf32, #tpu.memory_space<vmem>>, vector<3x8x4xf32>,
    %c0_48 = arith.constant 0 : index
    %c0_49 = arith.constant 0 : index
    %c0_50 = arith.constant 0 : index
    %c0_51 = arith.constant 0 : index
    %c0_52 = arith.constant 0 : index
    %21 = vector.load %arg4[%c0_48, %c0_49, %c0_50, %c0_51, %c0_52] : memref<1x1x1x9x8xf32, #tpu.memory_space<vmem>>, vector<1x1x1x8x4xf32>
    %22 = vector.shape_cast %21 : vector<1x1x1x8x4xf32> to vector<8x4xf32>
    %c3 = arith.constant 3 : index
    %c0_53 = arith.constant 0 : index
    %c24_54 = arith.constant 24 : index
    %23 = vector.load %arg8[%c3, %c0_53, %c24_54] : memref<4x8x36xf32, #tpu.memory_space<vmem>>, vector<1x8x4xf32>
    %24 = vector.shape_cast %23 : vector<1x8x4xf32> to vector<8x4xf32>
    %25 = vector.shape_cast %22 : vector<8x4xf32> to vector<1x8x4xf32>
    tpu.vector_store %arg8[%c3, %c0_53, %c24_54], %25 {strides = array<i32>} : memref<4x8x36xf32, #tpu.memory_space<vmem>>, vector<1x8x4xf32>,
    %c0_55 = arith.constant 0 : index
    %c1_56 = arith.constant 1 : index
    %c0_57 = arith.constant 0 : index
    %c0_58 = arith.constant 0 : index
    %c4_59 = arith.constant 4 : index
    %26 = vector.load %arg2[%c0_55, %c1_56, %c0_57, %c0_58, %c4_59] : memref<1x4x1x9x8xf32, #tpu.memory_space<vmem>>, vector<1x3x1x8x4xf32>
    %27 = vector.shape_cast %26 : vector<1x3x1x8x4xf32> to vector<3x8x4xf32>
    %c0_60 = arith.constant 0 : index
    %c0_61 = arith.constant 0 : index
    %c28 = arith.constant 28 : index
    %28 = vector.load %arg8[%c0_60, %c0_61, %c28] : memref<4x8x36xf32, #tpu.memory_space<vmem>>, vector<3x8x4xf32>
    tpu.vector_store %arg8[%c0_60, %c0_61, %c28], %27 {strides = array<i32>} : memref<4x8x36xf32, #tpu.memory_space<vmem>>, vector<3x8x4xf32>,
    %c0_62 = arith.constant 0 : index
    %c0_63 = arith.constant 0 : index
    %c0_64 = arith.constant 0 : index
    %c0_65 = arith.constant 0 : index
    %c4_66 = arith.constant 4 : index
    %29 = vector.load %arg4[%c0_62, %c0_63, %c0_64, %c0_65, %c4_66] : memref<1x1x1x9x8xf32, #tpu.memory_space<vmem>>, vector<1x1x1x8x4xf32>
    %30 = vector.shape_cast %29 : vector<1x1x1x8x4xf32> to vector<8x4xf32>
    %c3_67 = arith.constant 3 : index
    %c0_68 = arith.constant 0 : index
    %c28_69 = arith.constant 28 : index
    %31 = vector.load %arg8[%c3_67, %c0_68, %c28_69] : memref<4x8x36xf32, #tpu.memory_space<vmem>>, vector<1x8x4xf32>
    %32 = vector.shape_cast %31 : vector<1x8x4xf32> to vector<8x4xf32>
    %33 = vector.shape_cast %30 : vector<8x4xf32> to vector<1x8x4xf32>
    tpu.vector_store %arg8[%c3_67, %c0_68, %c28_69], %33 {strides = array<i32>} : memref<4x8x36xf32, #tpu.memory_space<vmem>>, vector<1x8x4xf32>,
    %c0_70 = arith.constant 0 : index
    %c1_71 = arith.constant 1 : index
    %c0_72 = arith.constant 0 : index
    %c1_73 = arith.constant 1 : index
    %c0_74 = arith.constant 0 : index
    %34 = vector.load %arg2[%c0_70, %c1_71, %c0_72, %c1_73, %c0_74] : memref<1x4x1x9x8xf32, #tpu.memory_space<vmem>>, vector<1x3x1x8x4xf32>
    %35 = vector.shape_cast %34 : vector<1x3x1x8x4xf32> to vector<3x8x4xf32>
    %c0_75 = arith.constant 0 : index
    %c0_76 = arith.constant 0 : index
    %c32 = arith.constant 32 : index
    %36 = vector.load %arg8[%c0_75, %c0_76, %c32] : memref<4x8x36xf32, #tpu.memory_space<vmem>>, vector<3x8x4xf32>
    tpu.vector_store %arg8[%c0_75, %c0_76, %c32], %35 {strides = array<i32>} : memref<4x8x36xf32, #tpu.memory_space<vmem>>, vector<3x8x4xf32>,
    %c0_77 = arith.constant 0 : index
    %c0_78 = arith.constant 0 : index
    %c0_79 = arith.constant 0 : index
    %c1_80 = arith.constant 1 : index
    %c0_81 = arith.constant 0 : index
    %37 = vector.load %arg4[%c0_77, %c0_78, %c0_79, %c1_80, %c0_81] : memref<1x1x1x9x8xf32, #tpu.memory_space<vmem>>, vector<1x1x1x8x4xf32>
    %38 = vector.shape_cast %37 : vector<1x1x1x8x4xf32> to vector<8x4xf32>
    %c3_82 = arith.constant 3 : index
    %c0_83 = arith.constant 0 : index
    %c32_84 = arith.constant 32 : index
    %39 = vector.load %arg8[%c3_82, %c0_83, %c32_84] : memref<4x8x36xf32, #tpu.memory_space<vmem>>, vector<1x8x4xf32>
    %40 = vector.shape_cast %39 : vector<1x8x4xf32> to vector<8x4xf32>
    %41 = vector.shape_cast %38 : vector<8x4xf32> to vector<1x8x4xf32>
    tpu.vector_store %arg8[%c3_82, %c0_83, %c32_84], %41 {strides = array<i32>} : memref<4x8x36xf32, #tpu.memory_space<vmem>>, vector<1x8x4xf32>,
    %c0_85 = arith.constant 0 : index
    %c0_86 = arith.constant 0 : index
    %c0_87 = arith.constant 0 : index
    %42 = vector.load %arg8[%c0_85, %c0_86, %c0_87] : memref<4x8x36xf32, #tpu.memory_space<vmem>>, vector<4x8x36xf32>
    %43 = vector.shape_cast %42 : vector<4x8x36xf32> to vector<32x36xf32>
    %c0_88 = arith.constant 0 : index
    %c0_89 = arith.constant 0 : index
    %44 = vector.load %arg5[%c0_88, %c0_89] : memref<36x4xf32, #tpu.memory_space<vmem>>, vector<36x4xf32>
    %cst = arith.constant dense<0.000000e+00> : vector<32x4xf32>
    %45 = tpu.matmul %43, %44, %cst {dimension_numbers = #tpu.dot_dimension_numbers<[1], [0], [0], [1], [0, 0, 1, 1], [], []>, precision = #tpu.contract_precision<fp32>} : vector<32x36xf32>, vector<36x4xf32>, vector<32x4xf32> -> vector<32x4xf32>
    %c0_90 = arith.constant 0 : index
    %c0_91 = arith.constant 0 : index
    %46 = vector.load %arg6[%c0_90, %c0_91] : memref<1x4xf32, #tpu.memory_space<vmem>>, vector<1x4xf32>
    %47 = vector.broadcast %46 : vector<1x4xf32> to vector<32x4xf32>
    %48 = arith.addf %45, %47 : vector<32x4xf32>
    %49 = vector.shape_cast %48 : vector<32x4xf32> to vector<4x8x4xf32>
    %c0_92 = arith.constant 0 : index
    %c0_93 = arith.constant 0 : index
    %c0_94 = arith.constant 0 : index
    %c0_95 = arith.constant 0 : index
    %50 = vector.load %arg7[%c0_92, %c0_93, %c0_94, %c0_95] : memref<1x4x8x4xf32, #tpu.memory_space<vmem>>, vector<1x4x8x4xf32>
    %51 = vector.shape_cast %50 : vector<1x4x8x4xf32> to vector<4x8x4xf32>
    %52 = vector.shape_cast %49 : vector<4x8x4xf32> to vector<1x4x8x4xf32>
    tpu.vector_store %arg7[%c0_92, %c0_93, %c0_94, %c0_95], %52 {strides = array<i32>} : memref<1x4x8x4xf32, #tpu.memory_space<vmem>>, vector<1x4x8x4xf32>,
    return
  }
  func.func @transform_0(%arg0: i32, %arg1: i32) -> (i32, i32, i32, i32, i32) {
    %c0_i32 = arith.constant 0 : i32
    %c0_i32_0 = arith.constant 0 : i32
    %c0_i32_1 = arith.constant 0 : i32
    %c0_i32_2 = arith.constant 0 : i32
    return %arg0, %arg1, %c0_i32, %c0_i32_0, %c0_i32_1 : i32, i32, i32, i32, i32
  }
  func.func @transform_1(%arg0: i32, %arg1: i32) -> (i32, i32, i32, i32, i32) {
    %c1_i32 = arith.constant 1 : i32
    %c0_i32 = arith.constant 0 : i32
    %c0_i32_0 = arith.constant 0 : i32
    %c0_i32_1 = arith.constant 0 : i32
    return %arg0, %arg1, %c1_i32, %c0_i32, %c0_i32_0 : i32, i32, i32, i32, i32
  }
  func.func @transform_2(%arg0: i32, %arg1: i32) -> (i32, i32, i32, i32, i32) {
    %c1_i32 = arith.constant 1 : i32
    %0 = arith.addi %arg1, %c1_i32 : i32
    %c4_i32 = arith.constant 4 : i32
    %1 = arith.muli %0, %c4_i32 : i32
    %c0_i32 = arith.constant 0 : i32
    %c0_i32_0 = arith.constant 0 : i32
    %c0_i32_1 = arith.constant 0 : i32
    %c0_i32_2 = arith.constant 0 : i32
    return %arg0, %1, %c0_i32, %c0_i32_0, %c0_i32_1 : i32, i32, i32, i32, i32
  }
  func.func @transform_3(%arg0: i32, %arg1: i32) -> (i32, i32) {
    %c0_i32 = arith.constant 0 : i32
    %c0_i32_0 = arith.constant 0 : i32
    %c0_i32_1 = arith.constant 0 : i32
    return %c0_i32, %c0_i32_0 : i32, i32
  }
  func.func @transform_4(%arg0: i32, %arg1: i32) -> (i32, i32) {
    %c0_i32 = arith.constant 0 : i32
    %c0_i32_0 = arith.constant 0 : i32
    %c0_i32_1 = arith.constant 0 : i32
    return %c0_i32, %c0_i32_0 : i32, i32
  }
  func.func @transform_5(%arg0: i32, %arg1: i32) -> (i32, i32, i32, i32) {
    %c0_i32 = arith.constant 0 : i32
    %c0_i32_0 = arith.constant 0 : i32
    %c0_i32_1 = arith.constant 0 : i32
    return %arg0, %arg1, %c0_i32, %c0_i32_0 : i32, i32, i32, i32
  }
}

</mosaic_0001>

<llo_original>
// kernel: tpu_custom_call.1
$region0: #{tpu_custom_call.1}
  #allocation0 [shape = 'u32[]', space=smem, size = 0x4, offset = 0x4, fixed_abs, tag = 'smem constant byte address 0x4 - core index']
  #allocation1 [shape = 'u32[144,128]{1,0:T(1,128)}', space=vmem, size = 0x12000, scoped, tag = 'internal scratch']
  #allocation2 [shape = 'f32[4,8,36]{2,1,0:T(8,128)}', space=vmem, size = 0x4000, scoped, tag = 'scratch operand']
  %s0 = inlined_call_operand.vmem [shape: f32[2,9,2,9,8], index: 0, kind: input, shape index: {}]
  %s1 = inlined_call_operand.vmem [shape: f32[2,9,2,9,8], index: 1, kind: input, shape index: {}]
  %s2 = inlined_call_operand.vmem [shape: f32[2,9,2,9,8], index: 2, kind: input, shape index: {}]
  %s3 = inlined_call_operand.vmem [shape: f32[36,4], index: 3, kind: input, shape index: {}]
  %s4 = inlined_call_operand.vmem [shape: f32[1,4], index: 4, kind: input, shape index: {}]
  %s5 = inlined_call_operand.vmem [shape: f32[2,8,8,4], index: 5, kind: output, shape index: {}]
  %s6 = sld [smem:[#allocation0]]
  $region157: #{tpu_custom_call.1} parent=0
    _
  %s8 = ssub.s32 1, %s6
  %s9 = scalar_select 0, %s8, %s6
  $region1: #{tpu_custom_call.1} parent=0
    #allocation3 [shape = 'u8[65536]{0}', space=vmem, size = 0x10000, scoped, tag = 'input window, operand 0']
    #allocation4 [shape = 'u8[65536]{0}', space=vmem, size = 0x10000, scoped, tag = 'input window, operand 1']
    loop: start=0, step=1, limit=6
    $region2: #{tpu_custom_call.1} parent=1 // loop_pre_header
      _
    $region3: #{tpu_custom_call.1} parent=1 // loop_header
      %s11 = sphi 0, %s15
      %p12 = scmp.ge.s32.totalorder %s11, 6
      %s18 = sphi 0, %s30
      %s19 = sphi 0, %s26
      %s20 = sphi 0, %s18
      %s21 = sphi 0, %s19
      %s22 = sphi 0, %s20
      %s23 = sphi 0, %s21
      %s35 = sphi 0, %s37
      %s38 = sphi 0, %s35
      %s39 = sphi 0, %s38
      %s55 = sphi 0, %s39
      %s63 = sphi 0, %s65
      %s66 = sphi 0, %s63
      %s67 = sphi 0, %s66
      %s83 = sphi 0, %s67
      %s95 = sphi 0, %s97
      %s98 = sphi 0, %s95
      %s99 = sphi 0, %s98
      %s115 = sphi 0, %s99
      %s119 = sphi 0, %s119
      %s121 = sphi 0, %s119
      %s122 = sphi 0, %s121
      %s136 = sphi 0, %s122
      %s140 = sphi 0, %s140
      %s142 = sphi 0, %s140
      %s143 = sphi 0, %s142
      %s157 = sphi 0, %s143
      %s165 = sphi 0, %s167
      %s168 = sphi 0, %s165
      %s169 = sphi 0, %s168
      %s185 = sphi 0, %s169
    $region4: #{tpu_custom_call.1} parent=1 // loop_header_branch
      %14 = sbr.rel (%p12) target = $region8
    $region5: #{tpu_custom_call.1} parent=1 // loop_body
      %s16 = ssub.s32 %s11, 1
      %s17 = ssub.s32 %s11, 2
      %s24 = sadd.s32 1, %s19
      %p25 = scmp.ge.s32.totalorder %s24, 2
      %s26 = scalar_select %p25, 0, %s24
      %s27 = sadd.s32 1, %s18
      %s28 = scalar_select %p25, %s27, %s18
      %p29 = scmp.ge.s32.totalorder %s28, 2
      %s30 = scalar_select %p29, 0, %s28
      %s31 = ssub.s32 %s18, %s30
      %s32 = ssub.s32 %s19, %s26
      %s33 = sor.u32 %s31, %s32
      %p34 = scmp.eq.s32.totalorder %s33, 0
      %s36 = sadd.s32 %s35, 1
      %s37 = scalar_select %p34, %s35, %s36
      %p40 = pneg %p34
      %p41 = scmp.eq.s32.totalorder %s11, 3
      %p42 = por %p40, %p41
      %p43 = scmp.ne.s32.totalorder %s35, %s38
      %p44 = scmp.eq.s32.totalorder %s11, 0
      %p45 = por %p43, %p44
      %p46 = scmp.ne.s32.totalorder %s35, %s38
      %p47 = scmp.eq.s32.totalorder %s16, 3
      %p48 = por %p46, %p47
      %p49 = scmp.ne.s32.totalorder %s38, %s39
      %p50 = scmp.eq.s32.totalorder %s16, 0
      %p51 = por %p49, %p50
      %p52 = scmp.ne.s32.totalorder %s38, %s39
      %p53 = scmp.eq.s32.totalorder %s17, 3
      %p54 = por %p52, %p53
      %p56 = scmp.ne.s32.totalorder %s39, %s55
      %p57 = scmp.eq.s32.totalorder %s17, 0
      %p58 = por %p56, %p57
      %s59 = ssub.s32 %s18, %s30
      %s60 = ssub.s32 %s19, %s26
      %s61 = sor.u32 %s59, %s60
      %p62 = scmp.eq.s32.totalorder %s61, 0
      %s64 = sadd.s32 %s63, 1
      %s65 = scalar_select %p62, %s63, %s64
      %p68 = pneg %p62
      %p69 = scmp.eq.s32.totalorder %s11, 3
      %p70 = por %p68, %p69
      %p71 = scmp.ne.s32.totalorder %s63, %s66
      %p72 = scmp.eq.s32.totalorder %s11, 0
      %p73 = por %p71, %p72
      %p74 = scmp.ne.s32.totalorder %s63, %s66
      %p75 = scmp.eq.s32.totalorder %s16, 3
      %p76 = por %p74, %p75
      %p77 = scmp.ne.s32.totalorder %s66, %s67
      %p78 = scmp.eq.s32.totalorder %s16, 0
      %p79 = por %p77, %p78
      %p80 = scmp.ne.s32.totalorder %s66, %s67
      %p81 = scmp.eq.s32.totalorder %s17, 3
      %p82 = por %p80, %p81
      %p84 = scmp.ne.s32.totalorder %s67, %s83
      %p85 = scmp.eq.s32.totalorder %s17, 0
      %p86 = por %p84, %p85
      %s87 = sadd.s32 %s19, 1
      %s88 = smul.u32 %s87, 4
      %s89 = sadd.s32 %s26, 1
      %s90 = smul.u32 %s89, 4
      %s91 = ssub.s32 %s18, %s30
      %s92 = ssub.s32 %s88, %s90
      %s93 = sor.u32 %s91, %s92
      %p94 = scmp.eq.s32.totalorder %s93, 0
      %s96 = sadd.s32 %s95, 1
      %s97 = scalar_select %p94, %s95, %s96
      %p100 = pneg %p94
      %p101 = scmp.eq.s32.totalorder %s11, 3
      %p102 = por %p100, %p101
      %p103 = scmp.ne.s32.totalorder %s95, %s98
      %p104 = scmp.eq.s32.totalorder %s11, 0
      %p105 = por %p103, %p104
      %p106 = scmp.ne.s32.totalorder %s95, %s98
      %p107 = scmp.eq.s32.totalorder %s16, 3
      %p108 = por %p106, %p107
      %p109 = scmp.ne.s32.totalorder %s98, %s99
      %p110 = scmp.eq.s32.totalorder %s16, 0
      %p111 = por %p109, %p110
      %p112 = scmp.ne.s32.totalorder %s98, %s99
      %p113 = scmp.eq.s32.totalorder %s17, 3
      %p114 = por %p112, %p113
      %p116 = scmp.ne.s32.totalorder %s99, %s115
      %p117 = scmp.eq.s32.totalorder %s17, 0
      %p118 = por %p116, %p117
      %s120 = sadd.s32 %s119, 1
      %p123 = scmp.eq.s32.totalorder %s11, 3
      %p124 = scmp.ne.s32.totalorder %s119, %s121
      %p125 = scmp.eq.s32.totalorder %s11, 0
      %p126 = por %p124, %p125
      %p127 = scmp.ne.s32.totalorder %s119, %s121
      %p128 = scmp.eq.s32.totalorder %s16, 3
      %p129 = por %p127, %p128
      %p130 = scmp.ne.s32.totalorder %s121, %s122
      %p131 = scmp.eq.s32.totalorder %s16, 0
      %p132 = por %p130, %p131
      %p133 = scmp.ne.s32.totalorder %s121, %s122
      %p134 = scmp.eq.s32.totalorder %s17, 3
      %p135 = por %p133, %p134
      %p137 = scmp.ne.s32.totalorder %s122, %s136
      %p138 = scmp.eq.s32.totalorder %s17, 0
      %p139 = por %p137, %p138
      %s141 = sadd.s32 %s140, 1
      %p144 = scmp.eq.s32.totalorder %s11, 3
      %p145 = scmp.ne.s32.totalorder %s140, %s142
      %p146 = scmp.eq.s32.totalorder %s11, 0
      %p147 = por %p145, %p146
      %p148 = scmp.ne.s32.totalorder %s140, %s142
      %p149 = scmp.eq.s32.totalorder %s16, 3
      %p150 = por %p148, %p149
      %p151 = scmp.ne.s32.totalorder %s142, %s143
      %p152 = scmp.eq.s32.totalorder %s16, 0
      %p153 = por %p151, %p152
      %p154 = scmp.ne.s32.totalorder %s142, %s143
      %p155 = scmp.eq.s32.totalorder %s17, 3
      %p156 = por %p154, %p155
      %p158 = scmp.ne.s32.totalorder %s143, %s157
      %p159 = scmp.eq.s32.totalorder %s17, 0
      %p160 = por %p158, %p159
      %s161 = ssub.s32 %s18, %s30
      %s162 = ssub.s32 %s19, %s26
      %s163 = sor.u32 %s161, %s162
      %p164 = scmp.eq.s32.totalorder %s163, 0
      %s166 = sadd.s32 %s165, 1
      %s167 = scalar_select %p164, %s165, %s166
      %p170 = pneg %p164
      %p171 = scmp.eq.s32.totalorder %s11, 3
      %p172 = por %p170, %p171
      %p173 = scmp.ne.s32.totalorder %s165, %s168
      %p174 = scmp.eq.s32.totalorder %s11, 0
      %p175 = por %p173, %p174
      %p176 = scmp.ne.s32.totalorder %s165, %s168
      %p177 = scmp.eq.s32.totalorder %s16, 3
      %p178 = por %p176, %p177
      %p179 = scmp.ne.s32.totalorder %s168, %s169
      %p180 = scmp.eq.s32.totalorder %s16, 0
      %p181 = por %p179, %p180
      %p182 = scmp.ne.s32.totalorder %s168, %s169
      %p183 = scmp.eq.s32.totalorder %s17, 3
      %p184 = por %p182, %p183
      %p186 = scmp.ne.s32.totalorder %s169, %s185
      %p187 = scmp.eq.s32.totalorder %s17, 0
      %p188 = por %p186, %p187
      %p189 = scmp.le.s32.totalorder 1, %s11
      %p190 = scmp.lt.s32.totalorder %s11, 5
      %p191 = pnand %p189, %p190
      %p192 = pneg %p191
      // Predicated region
      $region9: #{tpu_custom_call.1} parent=5 // pred_check
        _
      $region10: #{tpu_custom_call.1} parent=5 // pred_check_branch
        %194 = sbr.rel (%p191) target = $region12
      $region11: #{tpu_custom_call.1} parent=5 // pred_region
        %s195 = ssub.s32 %s11, 1
        // Predicated region
        $region13: #{tpu_custom_call.1} parent=11 // pred_check
          %p196 = pneg %p132
        $region14: #{tpu_custom_call.1} parent=11 // pred_check_branch
          %198 = sbr.rel (%p196) target = $region16
        $region15: #{tpu_custom_call.1} parent=11 // pred_region
          _
        $region16: #{tpu_custom_call.1} parent=11 // pred_fallthru
          _
        // Predicated region
        $region17: #{tpu_custom_call.1} parent=11 // pred_check
          %p199 = pneg %p153
        $region18: #{tpu_custom_call.1} parent=11 // pred_check_branch
          %201 = sbr.rel (%p199) target = $region20
        $region19: #{tpu_custom_call.1} parent=11 // pred_region
          _
        $region20: #{tpu_custom_call.1} parent=11 // pred_fallthru
          _
      $region12: #{tpu_custom_call.1} parent=5 // pred_fallthru
        _
      %p202 = scmp.lt.s32.totalorder %s11, 4
      // Predicated region
      $region21: #{tpu_custom_call.1} parent=5 // pred_check
        %p203 = pneg %p202
      $region22: #{tpu_custom_call.1} parent=5 // pred_check_branch
        %205 = sbr.rel (%p203) target = $region24
      $region23: #{tpu_custom_call.1} parent=5 // pred_region
        // Predicated region
        $region25: #{tpu_custom_call.1} parent=23 // pred_check
          %p206 = pneg %p45
        $region26: #{tpu_custom_call.1} parent=23 // pred_check_branch
          %208 = sbr.rel (%p206) target = $region28
        $region27: #{tpu_custom_call.1} parent=23 // pred_region
          %s209 = sand.u32 %s35, 1
          %s210 = sand.u32 %s35, 1
          %s211 = smul.addr %s210, 64
          %s212 = scalar_lea.vmem [#allocation3], %s211
          %s213 = smul.u32 4, %s19
          %s214 = ssub.s32 9, %s213
          %p215 = scmp.lt.s32.totalorder %s214, 4
          %s216 = scalar_select %p215, %s214, 4
          %s217 = smul.u32 128, %s216
          %s218 = smul.u32 %s217, 2
          %p219 = scmp.ne.s32.totalorder 0, %s218
          %s220 = smul.addr %s213, 4
          %s221 = smul.addr %s18, 36
          %s222 = sadd.s32 %s220, %s221
          %s223 = smul.addr %s222, 8
          %s224 = scalar_lea.vmem %s0, %s223
          // Predicated region
          $region29: #{tpu_custom_call.1} parent=27 // pred_check
            %p225 = pneg %p219
          $region30: #{tpu_custom_call.1} parent=27 // pred_check_branch
            %227 = sbr.rel (%p225) target = $region32
          $region31: #{tpu_custom_call.1} parent=27 // pred_region
            // Predicated region
            $region33: #{tpu_custom_call.1} parent=31 // pred_check
              _
            $region34: #{tpu_custom_call.1} parent=31 // pred_check_branch
              %229 = sbr.rel (0) target = $region36
            $region35: #{tpu_custom_call.1} parent=31 // pred_region
              // Predicated region
              $region55: #{tpu_custom_call.1} parent=35 // pred_check
                _
              $region56: #{tpu_custom_call.1} parent=35 // pred_check_branch
                %294 = sbr.rel (0) target = $region58
              $region57: #{tpu_custom_call.1} parent=35 // pred_region
                %s295 = sshrl.u32 %s216, 2
                // While loop
                $region59: #{tpu_custom_call.1} parent=57 // loop_pre_header
                  _
                $region60: #{tpu_custom_call.1} parent=57 // loop_header
                  %s297 = sphi 0, %s299
                  %p298 = scmp.ge.s32.totalorder %s297, %s295
                  %s302 = sphi 0, %s323
                  %s303 = sphi %s224, %s326
                  %s304 = sphi %s212, %s327
                $region61: #{tpu_custom_call.1} parent=57 // loop_header_branch
                  %301 = sbr.rel (%p298) target = $region65
                $region62: #{tpu_custom_call.1} parent=57 // loop_body
                  %v305 = vld [vmem:[%s303] sm:$0xff]
                  %306 = vst [vmem:[%s304] sm:$0xff] %v305
                  %v307 = vld [vmem:[%s303 + $0x20] sm:$0xff]
                  %308 = vst [vmem:[%s304 + $0x10] sm:$0xff] %v307
                  %v309 = vld [vmem:[%s303 + $0x40] sm:$0xff]
                  %310 = vst [vmem:[%s304 + $0x20] sm:$0xff] %v309
                  %v311 = vld [vmem:[%s303 + $0x60] sm:$0xff]
                  %312 = vst [vmem:[%s304 + $0x30] sm:$0xff] %v311
                  %v313 = vld [vmem:[%s303 + $0x8] sm:$0xff]
                  %314 = vst [vmem:[%s304 + $0x8] sm:$0xff] %v313
                  %v315 = vld [vmem:[%s303 + $0x28] sm:$0xff]
                  %316 = vst [vmem:[%s304 + $0x18] sm:$0xff] %v315
                  %v317 = vld [vmem:[%s303 + $0x48] sm:$0xff]
                  %318 = vst [vmem:[%s304 + $0x28] sm:$0xff] %v317
                  %v319 = vld [vmem:[%s303 + $0x68] sm:$0xff]
                  %320 = vst [vmem:[%s304 + $0x38] sm:$0xff] %v319
                  %s321 = sadd.s32 1, %s302
                  %p322 = scmp.ge.s32.totalorder %s321, %s295
                  %s323 = scalar_select %p322, 0, %s321
                  %s324 = smul.u32 %s323, 128
                  %s325 = smul.u32 %s323, 64
                  %s326 = scalar_lea.vmem %s224, %s324
                  %s327 = scalar_lea.vmem %s212, %s325 [#allocation3]
                $region63: #{tpu_custom_call.1} parent=57 // loop_footer
                  %s299 = sadd.s32 %s297, 1
                $region64: #{tpu_custom_call.1} parent=57 // loop_footer_branch
                  %296 = sbr.rel target = $region60
                $region65: #{tpu_custom_call.1} parent=57 // loop_exit
                  _
                %s328 = sshrl.u32 %s216, 2
                %s329 = sand.u32 %s216, 3
                %s330 = smul.u32 %s328, 4
                %s331 = smul.u32 32, %s330
                %s332 = scalar_lea.vmem %s224, %s331
                %s333 = smul.u32 16, %s330
                %s334 = scalar_lea.vmem %s212, %s333 [#allocation3]
                // While loop
                $region66: #{tpu_custom_call.1} parent=57 // loop_pre_header
                  _
                $region67: #{tpu_custom_call.1} parent=57 // loop_header
                  %s336 = sphi 0, %s338
                  %p337 = scmp.ge.s32.totalorder %s336, %s329
                  %s341 = sphi 0, %s350
                  %s342 = sphi %s332, %s353
                  %s343 = sphi %s334, %s354
                $region68: #{tpu_custom_call.1} parent=57 // loop_header_branch
                  %340 = sbr.rel (%p337) target = $region72
                $region69: #{tpu_custom_call.1} parent=57 // loop_body
                  %v344 = vld [vmem:[%s342] sm:$0xff]
                  %345 = vst [vmem:[%s343] sm:$0xff] %v344
                  %v346 = vld [vmem:[%s342 + $0x8] sm:$0xff]
                  %347 = vst [vmem:[%s343 + $0x8] sm:$0xff] %v346
                  %s348 = sadd.s32 1, %s341
                  %p349 = scmp.ge.s32.totalorder %s348, %s329
                  %s350 = scalar_select %p349, 0, %s348
                  %s351 = smul.u32 %s350, 32
                  %s352 = smul.u32 %s350, 16
                  %s353 = scalar_lea.vmem %s332, %s351
                  %s354 = scalar_lea.vmem %s334, %s352 [#allocation3]
                $region70: #{tpu_custom_call.1} parent=57 // loop_footer
                  %s338 = sadd.s32 %s336, 1
                $region71: #{tpu_custom_call.1} parent=57 // loop_footer_branch
                  %335 = sbr.rel target = $region67
                $region72: #{tpu_custom_call.1} parent=57 // loop_exit
                  _
              $region58: #{tpu_custom_call.1} parent=35 // pred_fallthru
                _
              // Predicated region
              $region73: #{tpu_custom_call.1} parent=35 // pred_check
                _
              $region74: #{tpu_custom_call.1} parent=35 // pred_check_branch
                %356 = sbr.rel target = $region76
              $region75: #{tpu_custom_call.1} parent=35 // pred_region
                _
              $region76: #{tpu_custom_call.1} parent=35 // pred_fallthru
                _
            $region36: #{tpu_custom_call.1} parent=31 // pred_fallthru
              _
            // Predicated region
            $region37: #{tpu_custom_call.1} parent=31 // pred_check
              _
            $region38: #{tpu_custom_call.1} parent=31 // pred_check_branch
              %231 = sbr.rel target = $region40
            $region39: #{tpu_custom_call.1} parent=31 // pred_region
              %s233 = sshrl.u32 %s216, 2
              // While loop
              $region41: #{tpu_custom_call.1} parent=39 // loop_pre_header
                _
              $region42: #{tpu_custom_call.1} parent=39 // loop_header
                %s235 = sphi 0, %s237
                %p236 = scmp.ge.s32.totalorder %s235, %s233
                %s240 = sphi 0, %s261
                %s241 = sphi %s224, %s264
                %s242 = sphi %s212, %s265
              $region43: #{tpu_custom_call.1} parent=39 // loop_header_branch
                %239 = sbr.rel (%p236) target = $region47
              $region44: #{tpu_custom_call.1} parent=39 // loop_body
                %v243 = vld [vmem:[%s241] sm:$0xff]
                %244 = vst [vmem:[%s242] sm:$0xff] %v243
                %v245 = vld [vmem:[%s241 + $0x20] sm:$0xff]
                %246 = vst [vmem:[%s242 + $0x10] sm:$0xff] %v245
                %v247 = vld [vmem:[%s241 + $0x40] sm:$0xff]
                %248 = vst [vmem:[%s242 + $0x20] sm:$0xff] %v247
                %v249 = vld [vmem:[%s241 + $0x60] sm:$0xff]
                %250 = vst [vmem:[%s242 + $0x30] sm:$0xff] %v249
                %v251 = vld [vmem:[%s241 + $0x8] sm:$0xff]
                %252 = vst [vmem:[%s242 + $0x8] sm:$0xff] %v251
                %v253 = vld [vmem:[%s241 + $0x28] sm:$0xff]
                %254 = vst [vmem:[%s242 + $0x18] sm:$0xff] %v253
                %v255 = vld [vmem:[%s241 + $0x48] sm:$0xff]
                %256 = vst [vmem:[%s242 + $0x28] sm:$0xff] %v255
                %v257 = vld [vmem:[%s241 + $0x68] sm:$0xff]
                %258 = vst [vmem:[%s242 + $0x38] sm:$0xff] %v257
                %s259 = sadd.s32 1, %s240
                %p260 = scmp.ge.s32.totalorder %s259, %s233
                %s261 = scalar_select %p260, 0, %s259
                %s262 = smul.u32 %s261, 128
                %s263 = smul.u32 %s261, 64
                %s264 = scalar_lea.vmem %s224, %s262
                %s265 = scalar_lea.vmem %s212, %s263 [#allocation3]
              $region45: #{tpu_custom_call.1} parent=39 // loop_footer
                %s237 = sadd.s32 %s235, 1
              $region46: #{tpu_custom_call.1} parent=39 // loop_footer_branch
                %234 = sbr.rel target = $region42
              $region47: #{tpu_custom_call.1} parent=39 // loop_exit
                _
              %s266 = sshrl.u32 %s216, 2
              %s267 = sand.u32 %s216, 3
              %s268 = smul.u32 %s266, 4
              %s269 = smul.u32 32, %s268
              %s270 = scalar_lea.vmem %s224, %s269
              %s271 = smul.u32 16, %s268
              %s272 = scalar_lea.vmem %s212, %s271 [#allocation3]
              // While loop
              $region48: #{tpu_custom_call.1} parent=39 // loop_pre_header
                _
              $region49: #{tpu_custom_call.1} parent=39 // loop_header
                %s274 = sphi 0, %s276
                %p275 = scmp.ge.s32.totalorder %s274, %s267
                %s279 = sphi 0, %s288
                %s280 = sphi %s270, %s291
                %s281 = sphi %s272, %s292
              $region50: #{tpu_custom_call.1} parent=39 // loop_header_branch
                %278 = sbr.rel (%p275) target = $region54
              $region51: #{tpu_custom_call.1} parent=39 // loop_body
                %v282 = vld [vmem:[%s280] sm:$0xff]
                %283 = vst [vmem:[%s281] sm:$0xff] %v282
                %v284 = vld [vmem:[%s280 + $0x8] sm:$0xff]
                %285 = vst [vmem:[%s281 + $0x8] sm:$0xff] %v284
                %s286 = sadd.s32 1, %s279
                %p287 = scmp.ge.s32.totalorder %s286, %s267
                %s288 = scalar_select %p287, 0, %s286
                %s289 = smul.u32 %s288, 32
                %s290 = smul.u32 %s288, 16
                %s291 = scalar_lea.vmem %s270, %s289
                %s292 = scalar_lea.vmem %s272, %s290 [#allocation3]
              $region52: #{tpu_custom_call.1} parent=39 // loop_footer
                %s276 = sadd.s32 %s274, 1
              $region53: #{tpu_custom_call.1} parent=39 // loop_footer_branch
                %273 = sbr.rel target = $region49
              $region54: #{tpu_custom_call.1} parent=39 // loop_exit
                _
            $region40: #{tpu_custom_call.1} parent=31 // pred_fallthru
              _
          $region32: #{tpu_custom_call.1} parent=27 // pred_fallthru
            _
          %357 = vnop
        $region28: #{tpu_custom_call.1} parent=23 // pred_fallthru
          _
        // Predicated region
        $region77: #{tpu_custom_call.1} parent=23 // pred_check
          %p358 = pneg %p73
        $region78: #{tpu_custom_call.1} parent=23 // pred_check_branch
          %360 = sbr.rel (%p358) target = $region80
        $region79: #{tpu_custom_call.1} parent=23 // pred_region
          %s361 = sand.u32 %s63, 1
          %s362 = sand.u32 %s63, 1
          %s363 = smul.addr %s362, 64
          %s364 = scalar_lea.vmem [#allocation4], %s363
          %s365 = smul.u32 4, %s19
          %s366 = ssub.s32 9, %s365
          %p367 = scmp.lt.s32.totalorder %s366, 4
          %s368 = scalar_select %p367, %s366, 4
          %s369 = smul.u32 128, %s368
          %s370 = smul.u32 %s369, 2
          %p371 = scmp.ne.s32.totalorder 0, %s370
          %s372 = smul.addr %s365, 4
          %s373 = sadd.s32 2, %s372
          %s374 = smul.addr %s18, 36
          %s375 = sadd.s32 %s373, %s374
          %s376 = smul.addr %s375, 8
          %s377 = scalar_lea.vmem %s1, %s376
          // Predicated region
          $region81: #{tpu_custom_call.1} parent=79 // pred_check
            %p378 = pneg %p371
          $region82: #{tpu_custom_call.1} parent=79 // pred_check_branch
            %380 = sbr.rel (%p378) target = $region84
          $region83: #{tpu_custom_call.1} parent=79 // pred_region
            // Predicated region
            $region85: #{tpu_custom_call.1} parent=83 // pred_check
              _
            $region86: #{tpu_custom_call.1} parent=83 // pred_check_branch
              %382 = sbr.rel (0) target = $region88
            $region87: #{tpu_custom_call.1} parent=83 // pred_region
              // Predicated region
              $region107: #{tpu_custom_call.1} parent=87 // pred_check
                _
              $region108: #{tpu_custom_call.1} parent=87 // pred_check_branch
                %447 = sbr.rel (0) target = $region110
              $region109: #{tpu_custom_call.1} parent=87 // pred_region
                %s448 = sshrl.u32 %s368, 2
                // While loop
                $region111: #{tpu_custom_call.1} parent=109 // loop_pre_header
                  _
                $region112: #{tpu_custom_call.1} parent=109 // loop_header
                  %s450 = sphi 0, %s452
                  %p451 = scmp.ge.s32.totalorder %s450, %s448
                  %s455 = sphi 0, %s476
                  %s456 = sphi %s377, %s479
                  %s457 = sphi %s364, %s480
                $region113: #{tpu_custom_call.1} parent=109 // loop_header_branch
                  %454 = sbr.rel (%p451) target = $region117
                $region114: #{tpu_custom_call.1} parent=109 // loop_body
                  %v458 = vld [vmem:[%s456] sm:$0xff]
                  %459 = vst [vmem:[%s457] sm:$0xff] %v458
                  %v460 = vld [vmem:[%s456 + $0x20] sm:$0xff]
                  %461 = vst [vmem:[%s457 + $0x10] sm:$0xff] %v460
                  %v462 = vld [vmem:[%s456 + $0x40] sm:$0xff]
                  %463 = vst [vmem:[%s457 + $0x20] sm:$0xff] %v462
                  %v464 = vld [vmem:[%s456 + $0x60] sm:$0xff]
                  %465 = vst [vmem:[%s457 + $0x30] sm:$0xff] %v464
                  %v466 = vld [vmem:[%s456 + $0x8] sm:$0xff]
                  %467 = vst [vmem:[%s457 + $0x8] sm:$0xff] %v466
                  %v468 = vld [vmem:[%s456 + $0x28] sm:$0xff]
                  %469 = vst [vmem:[%s457 + $0x18] sm:$0xff] %v468
                  %v470 = vld [vmem:[%s456 + $0x48] sm:$0xff]
                  %471 = vst [vmem:[%s457 + $0x28] sm:$0xff] %v470
                  %v472 = vld [vmem:[%s456 + $0x68] sm:$0xff]
                  %473 = vst [vmem:[%s457 + $0x38] sm:$0xff] %v472
                  %s474 = sadd.s32 1, %s455
                  %p475 = scmp.ge.s32.totalorder %s474, %s448
                  %s476 = scalar_select %p475, 0, %s474
                  %s477 = smul.u32 %s476, 128
                  %s478 = smul.u32 %s476, 64
                  %s479 = scalar_lea.vmem %s377, %s477
                  %s480 = scalar_lea.vmem %s364, %s478 [#allocation4]
                $region115: #{tpu_custom_call.1} parent=109 // loop_footer
                  %s452 = sadd.s32 %s450, 1
                $region116: #{tpu_custom_call.1} parent=109 // loop_footer_branch
                  %449 = sbr.rel target = $region112
                $region117: #{tpu_custom_call.1} parent=109 // loop_exit
                  _
                %s481 = sshrl.u32 %s368, 2
                %s482 = sand.u32 %s368, 3
                %s483 = smul.u32 %s481, 4
                %s484 = smul.u32 32, %s483
                %s485 = scalar_lea.vmem %s377, %s484
                %s486 = smul.u32 16, %s483
                %s487 = scalar_lea.vmem %s364, %s486 [#allocation4]
                // While loop
                $region118: #{tpu_custom_call.1} parent=109 // loop_pre_header
                  _
                $region119: #{tpu_custom_call.1} parent=109 // loop_header
                  %s489 = sphi 0, %s491
                  %p490 = scmp.ge.s32.totalorder %s489, %s482
                  %s494 = sphi 0, %s503
                  %s495 = sphi %s485, %s506
                  %s496 = sphi %s487, %s507
                $region120: #{tpu_custom_call.1} parent=109 // loop_header_branch
                  %493 = sbr.rel (%p490) target = $region124
                $region121: #{tpu_custom_call.1} parent=109 // loop_body
                  %v497 = vld [vmem:[%s495] sm:$0xff]
                  %498 = vst [vmem:[%s496] sm:$0xff] %v497
                  %v499 = vld [vmem:[%s495 + $0x8] sm:$0xff]
                  %500 = vst [vmem:[%s496 + $0x8] sm:$0xff] %v499
                  %s501 = sadd.s32 1, %s494
                  %p502 = scmp.ge.s32.totalorder %s501, %s482
                  %s503 = scalar_select %p502, 0, %s501
                  %s504 = smul.u32 %s503, 32
                  %s505 = smul.u32 %s503, 16
                  %s506 = scalar_lea.vmem %s485, %s504
                  %s507 = scalar_lea.vmem %s487, %s505 [#allocation4]
                $region122: #{tpu_custom_call.1} parent=109 // loop_footer
                  %s491 = sadd.s32 %s489, 1
                $region123: #{tpu_custom_call.1} parent=109 // loop_footer_branch
                  %488 = sbr.rel target = $region119
                $region124: #{tpu_custom_call.1} parent=109 // loop_exit
                  _
              $region110: #{tpu_custom_call.1} parent=87 // pred_fallthru
                _
              // Predicated region
              $region125: #{tpu_custom_call.1} parent=87 // pred_check
                _
              $region126: #{tpu_custom_call.1} parent=87 // pred_check_branch
                %509 = sbr.rel target = $region128
              $region127: #{tpu_custom_call.1} parent=87 // pred_region
                _
              $region128: #{tpu_custom_call.1} parent=87 // pred_fallthru
                _
            $region88: #{tpu_custom_call.1} parent=83 // pred_fallthru
              _
            // Predicated region
            $region89: #{tpu_custom_call.1} parent=83 // pred_check
              _
            $region90: #{tpu_custom_call.1} parent=83 // pred_check_branch
              %384 = sbr.rel target = $region92
            $region91: #{tpu_custom_call.1} parent=83 // pred_region
              %s386 = sshrl.u32 %s368, 2
              // While loop
              $region93: #{tpu_custom_call.1} parent=91 // loop_pre_header
                _
              $region94: #{tpu_custom_call.1} parent=91 // loop_header
                %s388 = sphi 0, %s390
                %p389 = scmp.ge.s32.totalorder %s388, %s386
                %s393 = sphi 0, %s414
                %s394 = sphi %s377, %s417
                %s395 = sphi %s364, %s418
              $region95: #{tpu_custom_call.1} parent=91 // loop_header_branch
                %392 = sbr.rel (%p389) target = $region99
              $region96: #{tpu_custom_call.1} parent=91 // loop_body
                %v396 = vld [vmem:[%s394] sm:$0xff]
                %397 = vst [vmem:[%s395] sm:$0xff] %v396
                %v398 = vld [vmem:[%s394 + $0x20] sm:$0xff]
                %399 = vst [vmem:[%s395 + $0x10] sm:$0xff] %v398
                %v400 = vld [vmem:[%s394 + $0x40] sm:$0xff]
                %401 = vst [vmem:[%s395 + $0x20] sm:$0xff] %v400
                %v402 = vld [vmem:[%s394 + $0x60] sm:$0xff]
                %403 = vst [vmem:[%s395 + $0x30] sm:$0xff] %v402
                %v404 = vld [vmem:[%s394 + $0x8] sm:$0xff]
                %405 = vst [vmem:[%s395 + $0x8] sm:$0xff] %v404
                %v406 = vld [vmem:[%s394 + $0x28] sm:$0xff]
                %407 = vst [vmem:[%s395 + $0x18] sm:$0xff] %v406
                %v408 = vld [vmem:[%s394 + $0x48] sm:$0xff]
                %409 = vst [vmem:[%s395 + $0x28] sm:$0xff] %v408
                %v410 = vld [vmem:[%s394 + $0x68] sm:$0xff]
                %411 = vst [vmem:[%s395 + $0x38] sm:$0xff] %v410
                %s412 = sadd.s32 1, %s393
                %p413 = scmp.ge.s32.totalorder %s412, %s386
                %s414 = scalar_select %p413, 0, %s412
                %s415 = smul.u32 %s414, 128
                %s416 = smul.u32 %s414, 64
                %s417 = scalar_lea.vmem %s377, %s415
                %s418 = scalar_lea.vmem %s364, %s416 [#allocation4]
              $region97: #{tpu_custom_call.1} parent=91 // loop_footer
                %s390 = sadd.s32 %s388, 1
              $region98: #{tpu_custom_call.1} parent=91 // loop_footer_branch
                %387 = sbr.rel target = $region94
              $region99: #{tpu_custom_call.1} parent=91 // loop_exit
                _
              %s419 = sshrl.u32 %s368, 2
              %s420 = sand.u32 %s368, 3
              %s421 = smul.u32 %s419, 4
              %s422 = smul.u32 32, %s421
              %s423 = scalar_lea.vmem %s377, %s422
              %s424 = smul.u32 16, %s421
              %s425 = scalar_lea.vmem %s364, %s424 [#allocation4]
              // While loop
              $region100: #{tpu_custom_call.1} parent=91 // loop_pre_header
                _
              $region101: #{tpu_custom_call.1} parent=91 // loop_header
                %s427 = sphi 0, %s429
                %p428 = scmp.ge.s32.totalorder %s427, %s420
                %s432 = sphi 0, %s441
                %s433 = sphi %s423, %s444
                %s434 = sphi %s425, %s445
              $region102: #{tpu_custom_call.1} parent=91 // loop_header_branch
                %431 = sbr.rel (%p428) target = $region106
              $region103: #{tpu_custom_call.1} parent=91 // loop_body
                %v435 = vld [vmem:[%s433] sm:$0xff]
                %436 = vst [vmem:[%s434] sm:$0xff] %v435
                %v437 = vld [vmem:[%s433 + $0x8] sm:$0xff]
                %438 = vst [vmem:[%s434 + $0x8] sm:$0xff] %v437
                %s439 = sadd.s32 1, %s432
                %p440 = scmp.ge.s32.totalorder %s439, %s420
                %s441 = scalar_select %p440, 0, %s439
                %s442 = smul.u32 %s441, 32
                %s443 = smul.u32 %s441, 16
                %s444 = scalar_lea.vmem %s423, %s442
                %s445 = scalar_lea.vmem %s425, %s443 [#allocation4]
              $region104: #{tpu_custom_call.1} parent=91 // loop_footer
                %s429 = sadd.s32 %s427, 1
              $region105: #{tpu_custom_call.1} parent=91 // loop_footer_branch
                %426 = sbr.rel target = $region101
              $region106: #{tpu_custom_call.1} parent=91 // loop_exit
                _
            $region92: #{tpu_custom_call.1} parent=83 // pred_fallthru
              _
          $region84: #{tpu_custom_call.1} parent=79 // pred_fallthru
            _
          %510 = vnop
        $region80: #{tpu_custom_call.1} parent=23 // pred_fallthru
          _
        // Predicated region
        $region129: #{tpu_custom_call.1} parent=23 // pred_check
          %p511 = pneg %p105
        $region130: #{tpu_custom_call.1} parent=23 // pred_check_branch
          %513 = sbr.rel (%p511) target = $region132
        $region131: #{tpu_custom_call.1} parent=23 // pred_region
          %s514 = sadd.s32 %s19, 1
          %s515 = smul.u32 %s514, 4
          %p516 = scmp.lt.s32.totalorder %s18, 1
          %s517 = scalar_select %p516, %s18, 1
          %p518 = scmp.lt.s32.totalorder %s515, 8
          %s519 = scalar_select %p518, %s515, 8
          %s520 = smul.addr %s519, 4
          %s521 = smul.addr %s517, 36
          %s522 = sadd.s32 %s520, %s521
          %s523 = smul.addr %s522, 8
          %s524 = scalar_lea.vmem %s2, %s523
          %s525 = sadd.s32 %s19, 1
          %s526 = smul.u32 %s525, 4
        $region132: #{tpu_custom_call.1} parent=23 // pred_fallthru
          _
      $region24: #{tpu_custom_call.1} parent=5 // pred_fallthru
        _
      %p527 = scmp.le.s32.totalorder 1, %s11
      %p528 = scmp.lt.s32.totalorder %s11, 5
      %p529 = pnand %p527, %p528
      %p530 = pneg %p529
      // Predicated region
      $region133: #{tpu_custom_call.1} parent=5 // pred_check
        _
      $region134: #{tpu_custom_call.1} parent=5 // pred_check_branch
        %532 = sbr.rel (%p529) target = $region136
      $region135: #{tpu_custom_call.1} parent=5 // pred_region
        %s533 = ssub.s32 %s11, 1
        %s534 = sand.u32 %s38, 1
        %s535 = sand.u32 %s38, 1
        %s536 = smul.addr %s535, 64
        %s537 = scalar_lea.vmem [#allocation3], %s536
        // Predicated region
        $region137: #{tpu_custom_call.1} parent=135 // pred_check
          %p538 = pneg %p51
        $region138: #{tpu_custom_call.1} parent=135 // pred_check_branch
          %540 = sbr.rel (%p538) target = $region140
        $region139: #{tpu_custom_call.1} parent=135 // pred_region
          _
        $region140: #{tpu_custom_call.1} parent=135 // pred_fallthru
          _
        %s541 = sand.u32 %s66, 1
        %s542 = sand.u32 %s66, 1
        %s543 = smul.addr %s542, 64
        %s544 = scalar_lea.vmem [#allocation4], %s543
        // Predicated region
        $region141: #{tpu_custom_call.1} parent=135 // pred_check
          %p545 = pneg %p79
        $region142: #{tpu_custom_call.1} parent=135 // pred_check_branch
          %547 = sbr.rel (%p545) target = $region144
        $region143: #{tpu_custom_call.1} parent=135 // pred_region
          _
        $region144: #{tpu_custom_call.1} parent=135 // pred_fallthru
          _
        %s548 = sand.u32 %s38, 1
        %s549 = sand.u32 %s38, 1
        %s550 = smul.addr %s549, 64
        %s551 = scalar_lea.vmem [#allocation3], %s550
        %p552 = pneg %p51
        %p553 = pneg %p48
        %s554 = sand.u32 %s66, 1
        %s555 = sand.u32 %s66, 1
        %s556 = smul.addr %s555, 64
        %s557 = scalar_lea.vmem [#allocation4], %s556
        %p558 = pneg %p79
        %p559 = pneg %p76
        %s560 = sadd.s32 %s21, 1
        %s561 = smul.u32 %s560, 4
        %p562 = scmp.lt.s32.totalorder %s20, 1
        %s563 = scalar_select %p562, %s20, 1
        %p564 = scmp.lt.s32.totalorder %s561, 8
        %s565 = scalar_select %p564, %s561, 8
        %s566 = smul.addr %s565, 4
        %s567 = smul.addr %s563, 36
        %s568 = sadd.s32 %s566, %s567
        %s569 = smul.addr %s568, 8
        %s570 = scalar_lea.vmem %s2, %s569
        %p571 = pneg %p111
        %p572 = pneg %p108
        %p573 = pneg %p132
        %p574 = pneg %p129
        %p575 = pneg %p153
        %p576 = pneg %p150
        %p577 = pneg %p181
        %p578 = pneg %p178
        %s579 = smul.u32 4, %s21
        %p580 = scmp.lt.s32.totalorder %s20, 1
        %s581 = scalar_select %p580, %s20, 1
        %p582 = scmp.lt.s32.totalorder %s579, 7
        %s583 = scalar_select %p582, %s579, 7
        %s584 = smul.addr %s581, 8
        %s585 = sadd.s32 %s583, %s584
        %s586 = smul.addr %s585, 8
        %s587 = scalar_lea.vmem %s5, %s586
        %s588 = smul.u32 4, %s21
        %s589 = ssub.s32 9, %s588
        %p590 = scmp.lt.s32.totalorder %s589, 4
        %s591 = scalar_select %p590, %s589, 4
        %s592 = smul.u32 128, %s591
        %s593 = smul.u32 %s592, 2
        %s594 = smul.u32 4, %s21
        %s595 = ssub.s32 9, %s594
        %p596 = scmp.lt.s32.totalorder %s595, 4
        %s597 = scalar_select %p596, %s595, 4
        %s598 = smul.u32 128, %s597
        %s599 = smul.u32 %s598, 2
        %s600 = sadd.s32 %s21, 1
        %s601 = smul.u32 %s600, 4
        %p602 = scmp.lt.s32.totalorder %s20, 1
        %s603 = scalar_select %p602, %s20, 1
        %p604 = scmp.lt.s32.totalorder %s601, 8
        %s605 = scalar_select %p604, %s601, 8
        %s606 = smul.addr %s605, 4
        %s607 = smul.addr %s603, 36
        %s608 = sadd.s32 %s606, %s607
        %s609 = smul.addr %s608, 8
        %s610 = scalar_lea.vmem %s2, %s609
        %s611 = sadd.s32 %s21, 1
        %s612 = smul.u32 %s611, 4
        %s613 = smul.u32 4, %s21
        %p614 = scmp.lt.s32.totalorder %s20, 1
        %s615 = scalar_select %p614, %s20, 1
        %p616 = scmp.lt.s32.totalorder %s613, 7
        %s617 = scalar_select %p616, %s613, 7
        %s618 = smul.addr %s615, 8
        %s619 = sadd.s32 %s617, %s618
        %s620 = smul.addr %s619, 8
        %s621 = scalar_lea.vmem %s5, %s620
        %s622 = smul.u32 4, %s21
        %v623 = vld [vmem:[%s537] sm:$0xff]
        %v624 = vld [vmem:[%s537 + $0x10] sm:$0xff]
        %v625 = vld [vmem:[%s537 + $0x20] sm:$0xff]
        %v626 = vld [vmem:[%s537 + $0x30] sm:$0xff]
        %vm627 = vcmask 31744
        %628 = vst.msk [vmem:[#allocation2] sm:$0xff] %vm627, %v623
        %629 = vst.msk [vmem:[#allocation2 + $0x8] sm:$0xff] %vm627, %v624
        %630 = vst.msk [vmem:[#allocation2 + $0x10] sm:$0xff] %vm627, %v625
        %631 = vst.msk [vmem:[#allocation2 + $0x18] sm:$0xff] %vm627, %v626
        %v632 = vld [vmem:[%s537] sm:$0xff]
        %v633 = vld [vmem:[%s537 + $0x10] sm:$0xff]
        %v634 = vld [vmem:[%s537 + $0x20] sm:$0xff]
        %v635 = vld [vmem:[%s537 + $0x30] sm:$0xff]
        %vm636 = vcmask 64544
        %637 = vst.msk [vmem:[#allocation2] sm:$0xff] %vm636, %v632
        %638 = vst.msk [vmem:[#allocation2 + $0x8] sm:$0xff] %vm636, %v633
        %639 = vst.msk [vmem:[#allocation2 + $0x10] sm:$0xff] %vm636, %v634
        %640 = vst.msk [vmem:[#allocation2 + $0x18] sm:$0xff] %vm636, %v635
        %v641 = vld [vmem:[%s537 + $0x1] sm:$0xff]
        %v642 = vld [vmem:[%s537 + $0x11] sm:$0xff]
        %v643 = vld [vmem:[%s537 + $0x21] sm:$0xff]
        %v644 = vld [vmem:[%s537 + $0x31] sm:$0xff]
        %649 = vrot.lane.b32.xlu0 %v641, 8
        %v650 = vpop.permute.xlu0 %649
        %651 = vrot.lane.b32.xlu0 %v642, 8
        %v652 = vpop.permute.xlu0 %651
        %653 = vrot.lane.b32.xlu0 %v643, 8
        %v654 = vpop.permute.xlu0 %653
        %655 = vrot.lane.b32.xlu0 %v644, 8
        %v656 = vpop.permute.xlu0 %655
        %vm661 = vcmask 97344
        %662 = vst.msk [vmem:[#allocation2] sm:$0xff] %vm661, %v650
        %663 = vst.msk [vmem:[#allocation2 + $0x8] sm:$0xff] %vm661, %v652
        %664 = vst.msk [vmem:[#allocation2 + $0x10] sm:$0xff] %vm661, %v654
        %665 = vst.msk [vmem:[#allocation2 + $0x18] sm:$0xff] %vm661, %v656
        %v666 = vld [vmem:[%s544] sm:$0xff]
        %v667 = vld [vmem:[%s544 + $0x10] sm:$0xff]
        %v668 = vld [vmem:[%s544 + $0x20] sm:$0xff]
        %v669 = vld [vmem:[%s544 + $0x30] sm:$0xff]
        %674 = vrot.lane.b32.xlu0 %v666, 12
        %v675 = vpop.permute.xlu0 %674
        %676 = vrot.lane.b32.xlu0 %v667, 12
        %v677 = vpop.permute.xlu0 %676
        %678 = vrot.lane.b32.xlu0 %v668, 12
        %v679 = vpop.permute.xlu0 %678
        %680 = vrot.lane.b32.xlu0 %v669, 12
        %v681 = vpop.permute.xlu0 %680
        %vm686 = vcmask 130144
        %687 = vst.msk [vmem:[#allocation2] sm:$0xff] %vm686, %v675
        %688 = vst.msk [vmem:[#allocation2 + $0x8] sm:$0xff] %vm686, %v677
        %689 = vst.msk [vmem:[#allocation2 + $0x10] sm:$0xff] %vm686, %v679
        %690 = vst.msk [vmem:[#allocation2 + $0x18] sm:$0xff] %vm686, %v681
        %v691 = vld [vmem:[%s544] sm:$0xff]
        %v692 = vld [vmem:[%s544 + $0x10] sm:$0xff]
        %v693 = vld [vmem:[%s544 + $0x20] sm:$0xff]
        %v694 = vld [vmem:[%s544 + $0x30] sm:$0xff]
        %699 = vrot.lane.b32.xlu0 %v691, 12
        %v700 = vpop.permute.xlu0 %699
        %701 = vrot.lane.b32.xlu0 %v692, 12
        %v702 = vpop.permute.xlu0 %701
        %703 = vrot.lane.b32.xlu0 %v693, 12
        %v704 = vpop.permute.xlu0 %703
        %705 = vrot.lane.b32.xlu0 %v694, 12
        %v706 = vpop.permute.xlu0 %705
        %vm711 = vcmask 162944
        %712 = vst.msk [vmem:[#allocation2] sm:$0xff] %vm711, %v700
        %713 = vst.msk [vmem:[#allocation2 + $0x8] sm:$0xff] %vm711, %v702
        %714 = vst.msk [vmem:[#allocation2 + $0x10] sm:$0xff] %vm711, %v704
        %715 = vst.msk [vmem:[#allocation2 + $0x18] sm:$0xff] %vm711, %v706
        %v716 = vld [vmem:[%s544 + $0x1] sm:$0xff]
        %v717 = vld [vmem:[%s544 + $0x11] sm:$0xff]
        %v718 = vld [vmem:[%s544 + $0x21] sm:$0xff]
        %v719 = vld [vmem:[%s544 + $0x31] sm:$0xff]
        %724 = vrot.lane.b32.xlu0 %v716, 20
        %v725 = vpop.permute.xlu0 %724
        %726 = vrot.lane.b32.xlu0 %v717, 20
        %v727 = vpop.permute.xlu0 %726
        %728 = vrot.lane.b32.xlu0 %v718, 20
        %v729 = vpop.permute.xlu0 %728
        %730 = vrot.lane.b32.xlu0 %v719, 20
        %v731 = vpop.permute.xlu0 %730
        %vm736 = vcmask 195744
        %737 = vst.msk [vmem:[#allocation2] sm:$0xff] %vm736, %v725
        %738 = vst.msk [vmem:[#allocation2 + $0x8] sm:$0xff] %vm736, %v727
        %739 = vst.msk [vmem:[#allocation2 + $0x10] sm:$0xff] %vm736, %v729
        %740 = vst.msk [vmem:[#allocation2 + $0x18] sm:$0xff] %vm736, %v731
        %s741 = scalar_lea.vmem %s537, 16 [#allocation3]
        %v742 = vld [vmem:[%s741] sm:$0xff]
        %v743 = vld [vmem:[%s741 + $0x10] sm:$0xff]
        %v744 = vld [vmem:[%s741 + $0x20] sm:$0xff]
        %748 = vrot.lane.b32.xlu0 %v742, 24
        %v749 = vpop.permute.xlu0 %748
        %750 = vrot.lane.b32.xlu0 %v743, 24
        %v751 = vpop.permute.xlu0 %750
        %752 = vrot.lane.b32.xlu0 %v744, 24
        %v753 = vpop.permute.xlu0 %752
        %vm757 = vcmask 228544
        %758 = vst.msk [vmem:[#allocation2] sm:$0xff] %vm757, %v749
        %759 = vst.msk [vmem:[#allocation2 + $0x8] sm:$0xff] %vm757, %v751
        %760 = vst.msk [vmem:[#allocation2 + $0x10] sm:$0xff] %vm757, %v753
        %v761 = vld [vmem:[%s610] sm:$0xff]
        %763 = vrot.lane.b32.xlu0 %v761, 24
        %v764 = vpop.permute.xlu0 %763
        %s766 = scalar_lea.vmem [#allocation2], 24
        %767 = vst.msk [vmem:[%s766] sm:$0xff] %vm757, %v764
        %v768 = vld [vmem:[%s741] sm:$0xff]
        %v769 = vld [vmem:[%s741 + $0x10] sm:$0xff]
        %v770 = vld [vmem:[%s741 + $0x20] sm:$0xff]
        %774 = vrot.lane.b32.xlu0 %v768, 24
        %v775 = vpop.permute.xlu0 %774
        %776 = vrot.lane.b32.xlu0 %v769, 24
        %v777 = vpop.permute.xlu0 %776
        %778 = vrot.lane.b32.xlu0 %v770, 24
        %v779 = vpop.permute.xlu0 %778
        %vm783 = vcmask 261344
        %784 = vst.msk [vmem:[#allocation2] sm:$0xff] %vm783, %v775
        %785 = vst.msk [vmem:[#allocation2 + $0x8] sm:$0xff] %vm783, %v777
        %786 = vst.msk [vmem:[#allocation2 + $0x10] sm:$0xff] %vm783, %v779
        %v787 = vld [vmem:[%s610] sm:$0xff]
        %789 = vrot.lane.b32.xlu0 %v787, 24
        %v790 = vpop.permute.xlu0 %789
        %792 = vst.msk [vmem:[%s766] sm:$0xff] %vm783, %v790
        %v793 = vld [vmem:[%s741 + $0x1] sm:$0xff]
        %v794 = vld [vmem:[%s741 + $0x11] sm:$0xff]
        %v795 = vld [vmem:[%s741 + $0x21] sm:$0xff]
        %799 = vrot.lane.b32.xlu0 %v793, 32
        %v800 = vpop.permute.xlu0 %799
        %801 = vrot.lane.b32.xlu0 %v794, 32
        %v802 = vpop.permute.xlu0 %801
        %803 = vrot.lane.b32.xlu0 %v795, 32
        %v804 = vpop.permute.xlu0 %803
        %vm808 = vcmask 294144
        %809 = vst.msk [vmem:[#allocation2] sm:$0xff] %vm808, %v800
        %810 = vst.msk [vmem:[#allocation2 + $0x8] sm:$0xff] %vm808, %v802
        %811 = vst.msk [vmem:[#allocation2 + $0x10] sm:$0xff] %vm808, %v804
        %v812 = vld [vmem:[%s610 + $0x1] sm:$0xff]
        %814 = vrot.lane.b32.xlu0 %v812, 32
        %v815 = vpop.permute.xlu0 %814
        %817 = vst.msk [vmem:[%s766] sm:$0xff] %vm808, %v815
        %v818 = vld [vmem:[#allocation2] sm:$0xff]
        %v819 = vld [vmem:[#allocation2 + $0x8] sm:$0xff]
        %v820 = vld [vmem:[#allocation2 + $0x10] sm:$0xff]
        %v821 = vld [vmem:[#allocation2 + $0x18] sm:$0xff]
        %v822 = vld [vmem:[%s3] sm:$0xff]
        %v823 = vld [vmem:[%s3 + $0x8] sm:$0xff]
        %v824 = vld [vmem:[%s3 + $0x10] sm:$0xff]
        %v825 = vld [vmem:[%s3 + $0x18] sm:$0xff]
        %v826 = vld [vmem:[%s3 + $0x20] sm:$0xf]
        %v827 = vld [vmem:[%s4] sm:$0x1]
        %v829 = vlaneseq
        %v830 = vshrl.u32 %v829, 7
        %v831 = vsub.s32 0, %v830
        %v832 = vrot.slane %v827, %v831
        %vm834 = vcmask 293888
        %v836 = vsel %vm834, %v818, 0
        %v839 = vsel %vm834, %v819, 0
        %v842 = vsel %vm834, %v820, 0
        %v845 = vsel %vm834, %v821, 0
        %vm847 = vcmask 1043456
        %v849 = vsel %vm847, %v826, 0
        %851 = vmatprep.subr.mxu0 0.0
        %v852 = vand.u32 %v822, 4294901760
        %853 = vmatpush1.msra.mxu0 %v852
        %854 = vmatprep.subr.mxu0 0.0
        %v855 = vand.u32 %v823, 4294901760
        %856 = vmatpush1.msra.mxu0 %v855
        %857 = vmatprep.subr.mxu0 0.0
        %v858 = vand.u32 %v824, 4294901760
        %859 = vmatpush1.msra.mxu0 %v858
        %860 = vmatprep.subr.mxu0 0.0
        %v861 = vand.u32 %v825, 4294901760
        %862 = vmatpush1.msra.mxu0 %v861
        %863 = vmatprep.subr.mxu0 0.0
        %v864 = vand.u32 %v849, 4294901760
        %865 = vmatpush1.msra.mxu0 %v864
        %866 = vmatprep.subr.mxu0 0.0
        %867 = vmatpush1.msra.mxu0 0.0
        %868 = vmatprep.subr.mxu0 0.0
        %869 = vmatpush1.msra.mxu0 0.0
        %870 = vmatprep.subr.mxu0 0.0
        %871 = vmatpush1.msra.mxu0 0.0
        %872 = vmatprep.subr.mxu0 0.0
        %873 = vmatpush1.msra.mxu0 0.0
        %874 = vmatprep.subr.mxu0 0.0
        %875 = vmatpush1.msra.mxu0 0.0
        %876 = vmatprep.subr.mxu0 0.0
        %877 = vmatpush1.msra.mxu0 0.0
        %878 = vmatprep.subr.mxu0 0.0
        %879 = vmatpush1.msra.mxu0 0.0
        %880 = vmatprep.subr.mxu0 0.0
        %881 = vmatpush1.msra.mxu0 0.0
        %882 = vmatprep.subr.mxu0 0.0
        %883 = vmatpush1.msra.mxu0 0.0
        %884 = vmatprep.subr.mxu0 0.0
        %885 = vmatpush1.msra.mxu0 0.0
        %886 = vmatprep.subr.mxu0 0.0
        %887 = vmatpush1.msra.mxu0 0.0
        %888 = vmatprep.subr.mxu0 0.0
        %889 = vmatpush1.msra.mxu0 0.0
        %890 = vmatprep.subr.mxu0 0.0
        %891 = vmatpush1.msra.mxu0 0.0
        %892 = vmatprep.subr.mxu0 0.0
        %893 = vmatpush1.msra.mxu0 0.0
        %894 = vmatprep.subr.mxu0 0.0
        %895 = vmatpush1.msra.mxu0 0.0
        %896 = vmatprep.subr.mxu0 0.0
        %897 = vmatpush1.msra.mxu0 0.0
        %898 = vmatprep.subr.mxu0 0.0
        %899 = vmatpush1.msra.mxu0 0.0
        %900 = vmatprep.subr.mxu0 0.0
        %901 = vmatpush1.msra.mxu0 0.0
        %902 = vmatprep.subr.mxu0 0.0
        %903 = vmatpush1.msra.mxu0 0.0
        %904 = vmatprep.subr.mxu0 0.0
        %905 = vmatpush1.msra.mxu0 0.0
        %906 = vmatprep.subr.mxu0 0.0
        %907 = vmatpush1.msra.mxu0 0.0
        %908 = vmatprep.subr.mxu0 0.0
        %909 = vmatpush1.msra.mxu0 0.0
        %910 = vmatprep.subr.mxu0 0.0
        %911 = vmatpush1.msra.mxu0 0.0
        %912 = vmatprep.subr.mxu0 0.0
        %913 = vmatpush1.msra.mxu0 0.0
        %914 = vmatprep.subr.mxu0 0.0
        %915 = vmatpush1.msra.mxu0 0.0
        %916 = vmatprep.subr.mxu0 0.0
        %917 = vmatpush1.msra.mxu0 0.0
        %918 = vmatprep.subr.mxu0 0.0
        %919 = vmatpush1.msra.mxu0 0.0
        %920 = vmatprep.mubr.f32.mxu0 0.0
        %v921 = vand.u32 %v836, 4294901760
        %v922 = vsub.f32 %v836, %v921
        %v923 = vand.u32 %v922, 4294901760
        %v924 = vsub.f32 %v922, %v923
        %v925 = vand.u32 %v924, 4294901760
        %926 = vmatmul.mubr.f32.gmra.mrb[0].mxu0 %v925
        %v927 = vpop.f32.mrb[0].mxu0
        %v928 = vadd.f32 %v832, %v927
        %v929 = vpop.f32.mrb[0].mxu0
        %930 = vmatprep.mubr.f32.mxu0 0.0
        %v931 = vand.u32 %v839, 4294901760
        %v932 = vsub.f32 %v839, %v931
        %v933 = vand.u32 %v932, 4294901760
        %v934 = vsub.f32 %v932, %v933
        %v935 = vand.u32 %v934, 4294901760
        %936 = vmatmul.mubr.f32.gmra.mrb[0].mxu0 %v935
        %v937 = vpop.f32.mrb[0].mxu0
        %v938 = vadd.f32 %v832, %v937
        %v939 = vpop.f32.mrb[0].mxu0
        %940 = vmatprep.mubr.f32.mxu0 0.0
        %v941 = vand.u32 %v842, 4294901760
        %v942 = vsub.f32 %v842, %v941
        %v943 = vand.u32 %v942, 4294901760
        %v944 = vsub.f32 %v942, %v943
        %v945 = vand.u32 %v944, 4294901760
        %946 = vmatmul.mubr.f32.gmra.mrb[0].mxu0 %v945
        %v947 = vpop.f32.mrb[0].mxu0
        %v948 = vadd.f32 %v832, %v947
        %v949 = vpop.f32.mrb[0].mxu0
        %950 = vmatprep.mubr.f32.mxu0 0.0
        %v951 = vand.u32 %v845, 4294901760
        %v952 = vsub.f32 %v845, %v951
        %v953 = vand.u32 %v952, 4294901760
        %v954 = vsub.f32 %v952, %v953
        %v955 = vand.u32 %v954, 4294901760
        %956 = vmatmul.mubr.f32.gmra.mrb[0].mxu0 %v955
        %v957 = vpop.f32.mrb[0].mxu0
        %v958 = vadd.f32 %v832, %v957
        %v959 = vpop.f32.mrb[0].mxu0
        %960 = vdwg.mxu0
        %961 = vmatprep.subr.mxu0 0.0
        %v962 = vand.u32 %v822, 4294901760
        %v963 = vsub.f32 %v822, %v962
        %v964 = vand.u32 %v963, 4294901760
        %v965 = vsub.f32 %v963, %v964
        %v966 = vand.u32 %v965, 4294901760
        %967 = vmatpush1.msra.mxu0 %v966
        %968 = vmatprep.subr.mxu0 0.0
        %v969 = vand.u32 %v823, 4294901760
        %v970 = vsub.f32 %v823, %v969
        %v971 = vand.u32 %v970, 4294901760
        %v972 = vsub.f32 %v970, %v971
        %v973 = vand.u32 %v972, 4294901760
        %974 = vmatpush1.msra.mxu0 %v973
        %975 = vmatprep.subr.mxu0 0.0
        %v976 = vand.u32 %v824, 4294901760
        %v977 = vsub.f32 %v824, %v976
        %v978 = vand.u32 %v977, 4294901760
        %v979 = vsub.f32 %v977, %v978
        %v980 = vand.u32 %v979, 4294901760
        %981 = vmatpush1.msra.mxu0 %v980
        %982 = vmatprep.subr.mxu0 0.0
        %v983 = vand.u32 %v825, 4294901760
        %v984 = vsub.f32 %v825, %v983
        %v985 = vand.u32 %v984, 4294901760
        %v986 = vsub.f32 %v984, %v985
        %v987 = vand.u32 %v986, 4294901760
        %988 = vmatpush1.msra.mxu0 %v987
        %989 = vmatprep.subr.mxu0 0.0
        %v990 = vand.u32 %v849, 4294901760
        %v991 = vsub.f32 %v849, %v990
        %v992 = vand.u32 %v991, 4294901760
        %v993 = vsub.f32 %v991, %v992
        %v994 = vand.u32 %v993, 4294901760
        %995 = vmatpush1.msra.mxu0 %v994
        %996 = vmatprep.subr.mxu0 0.0
        %997 = vmatpush1.msra.mxu0 0.0
        %998 = vmatprep.subr.mxu0 0.0
        %999 = vmatpush1.msra.mxu0 0.0
        %1000 = vmatprep.subr.mxu0 0.0
        %1001 = vmatpush1.msra.mxu0 0.0
        %1002 = vmatprep.subr.mxu0 0.0
        %1003 = vmatpush1.msra.mxu0 0.0
        %1004 = vmatprep.subr.mxu0 0.0
        %1005 = vmatpush1.msra.mxu0 0.0
        %1006 = vmatprep.subr.mxu0 0.0
        %1007 = vmatpush1.msra.mxu0 0.0
        %1008 = vmatprep.subr.mxu0 0.0
        %1009 = vmatpush1.msra.mxu0 0.0
        %1010 = vmatprep.subr.mxu0 0.0
        %1011 = vmatpush1.msra.mxu0 0.0
        %1012 = vmatprep.subr.mxu0 0.0
        %1013 = vmatpush1.msra.mxu0 0.0
        %1014 = vmatprep.subr.mxu0 0.0
        %1015 = vmatpush1.msra.mxu0 0.0
        %1016 = vmatprep.subr.mxu0 0.0
        %1017 = vmatpush1.msra.mxu0 0.0
        %1018 = vmatprep.subr.mxu0 0.0
        %1019 = vmatpush1.msra.mxu0 0.0
        %1020 = vmatprep.subr.mxu0 0.0
        %1021 = vmatpush1.msra.mxu0 0.0
        %1022 = vmatprep.subr.mxu0 0.0
        %1023 = vmatpush1.msra.mxu0 0.0
        %1024 = vmatprep.subr.mxu0 0.0
        %1025 = vmatpush1.msra.mxu0 0.0
        %1026 = vmatprep.subr.mxu0 0.0
        %1027 = vmatpush1.msra.mxu0 0.0
        %1028 = vmatprep.subr.mxu0 0.0
        %1029 = vmatpush1.msra.mxu0 0.0
        %1030 = vmatprep.subr.mxu0 0.0
        %1031 = vmatpush1.msra.mxu0 0.0
        %1032 = vmatprep.subr.mxu0 0.0
        %1033 = vmatpush1.msra.mxu0 0.0
        %1034 = vmatprep.subr.mxu0 0.0
        %1035 = vmatpush1.msra.mxu0 0.0
        %1036 = vmatprep.subr.mxu0 0.0
        %1037 = vmatpush1.msra.mxu0 0.0
        %1038 = vmatprep.subr.mxu0 0.0
        %1039 = vmatpush1.msra.mxu0 0.0
        %1040 = vmatprep.subr.mxu0 0.0
        %1041 = vmatpush1.msra.mxu0 0.0
        %1042 = vmatprep.subr.mxu0 0.0
        %1043 = vmatpush1.msra.mxu0 0.0
        %1044 = vmatprep.subr.mxu0 0.0
        %1045 = vmatpush1.msra.mxu0 0.0
        %1046 = vmatprep.subr.mxu0 0.0
        %1047 = vmatpush1.msra.mxu0 0.0
        %1048 = vmatprep.subr.mxu0 0.0
        %1049 = vmatpush1.msra.mxu0 0.0
        %1050 = vmatprep.mubr.f32.mxu0 0.0
        %v1051 = vand.u32 %v836, 4294901760
        %1052 = vmatmul.mubr.f32.gmra.mrb[0].mxu0 %v1051
        %v1053 = vpop.f32.mrb[0].mxu0
        %v1054 = vadd.f32 %v928, %v1053
        %v1055 = vpop.f32.mrb[0].mxu0
        %1056 = vmatprep.mubr.f32.mxu0 0.0
        %v1057 = vand.u32 %v839, 4294901760
        %1058 = vmatmul.mubr.f32.gmra.mrb[0].mxu0 %v1057
        %v1059 = vpop.f32.mrb[0].mxu0
        %v1060 = vadd.f32 %v938, %v1059
        %v1061 = vpop.f32.mrb[0].mxu0
        %1062 = vmatprep.mubr.f32.mxu0 0.0
        %v1063 = vand.u32 %v842, 4294901760
        %1064 = vmatmul.mubr.f32.gmra.mrb[0].mxu0 %v1063
        %v1065 = vpop.f32.mrb[0].mxu0
        %v1066 = vadd.f32 %v948, %v1065
        %v1067 = vpop.f32.mrb[0].mxu0
        %1068 = vmatprep.mubr.f32.mxu0 0.0
        %v1069 = vand.u32 %v845, 4294901760
        %1070 = vmatmul.mubr.f32.gmra.mrb[0].mxu0 %v1069
        %v1071 = vpop.f32.mrb[0].mxu0
        %v1072 = vadd.f32 %v958, %v1071
        %v1073 = vpop.f32.mrb[0].mxu0
        %1074 = vdwg.mxu0
        %1075 = vmatprep.subr.mxu0 0.0
        %v1076 = vand.u32 %v822, 4294901760
        %v1077 = vsub.f32 %v822, %v1076
        %1078 = vmatpush1.msra.mxu0 %v1077
        %1079 = vmatprep.subr.mxu0 0.0
        %v1080 = vand.u32 %v823, 4294901760
        %v1081 = vsub.f32 %v823, %v1080
        %1082 = vmatpush1.msra.mxu0 %v1081
        %1083 = vmatprep.subr.mxu0 0.0
        %v1084 = vand.u32 %v824, 4294901760
        %v1085 = vsub.f32 %v824, %v1084
        %1086 = vmatpush1.msra.mxu0 %v1085
        %1087 = vmatprep.subr.mxu0 0.0
        %v1088 = vand.u32 %v825, 4294901760
        %v1089 = vsub.f32 %v825, %v1088
        %1090 = vmatpush1.msra.mxu0 %v1089
        %1091 = vmatprep.subr.mxu0 0.0
        %v1092 = vand.u32 %v849, 4294901760
        %v1093 = vsub.f32 %v849, %v1092
        %1094 = vmatpush1.msra.mxu0 %v1093
        %1095 = vmatprep.subr.mxu0 0.0
        %1096 = vmatpush1.msra.mxu0 0.0
        %1097 = vmatprep.subr.mxu0 0.0
        %1098 = vmatpush1.msra.mxu0 0.0
        %1099 = vmatprep.subr.mxu0 0.0
        %1100 = vmatpush1.msra.mxu0 0.0
        %1101 = vmatprep.subr.mxu0 0.0
        %1102 = vmatpush1.msra.mxu0 0.0
        %1103 = vmatprep.subr.mxu0 0.0
        %1104 = vmatpush1.msra.mxu0 0.0
        %1105 = vmatprep.subr.mxu0 0.0
        %1106 = vmatpush1.msra.mxu0 0.0
        %1107 = vmatprep.subr.mxu0 0.0
        %1108 = vmatpush1.msra.mxu0 0.0
        %1109 = vmatprep.subr.mxu0 0.0
        %1110 = vmatpush1.msra.mxu0 0.0
        %1111 = vmatprep.subr.mxu0 0.0
        %1112 = vmatpush1.msra.mxu0 0.0
        %1113 = vmatprep.subr.mxu0 0.0
        %1114 = vmatpush1.msra.mxu0 0.0
        %1115 = vmatprep.subr.mxu0 0.0
        %1116 = vmatpush1.msra.mxu0 0.0
        %1117 = vmatprep.subr.mxu0 0.0
        %1118 = vmatpush1.msra.mxu0 0.0
        %1119 = vmatprep.subr.mxu0 0.0
        %1120 = vmatpush1.msra.mxu0 0.0
        %1121 = vmatprep.subr.mxu0 0.0
        %1122 = vmatpush1.msra.mxu0 0.0
        %1123 = vmatprep.subr.mxu0 0.0
        %1124 = vmatpush1.msra.mxu0 0.0
        %1125 = vmatprep.subr.mxu0 0.0
        %1126 = vmatpush1.msra.mxu0 0.0
        %1127 = vmatprep.subr.mxu0 0.0
        %1128 = vmatpush1.msra.mxu0 0.0
        %1129 = vmatprep.subr.mxu0 0.0
        %1130 = vmatpush1.msra.mxu0 0.0
        %1131 = vmatprep.subr.mxu0 0.0
        %1132 = vmatpush1.msra.mxu0 0.0
        %1133 = vmatprep.subr.mxu0 0.0
        %1134 = vmatpush1.msra.mxu0 0.0
        %1135 = vmatprep.subr.mxu0 0.0
        %1136 = vmatpush1.msra.mxu0 0.0
        %1137 = vmatprep.subr.mxu0 0.0
        %1138 = vmatpush1.msra.mxu0 0.0
        %1139 = vmatprep.subr.mxu0 0.0
        %1140 = vmatpush1.msra.mxu0 0.0
        %1141 = vmatprep.subr.mxu0 0.0
        %1142 = vmatpush1.msra.mxu0 0.0
        %1143 = vmatprep.subr.mxu0 0.0
        %1144 = vmatpush1.msra.mxu0 0.0
        %1145 = vmatprep.subr.mxu0 0.0
        %1146 = vmatpush1.msra.mxu0 0.0
        %1147 = vmatprep.subr.mxu0 0.0
        %1148 = vmatpush1.msra.mxu0 0.0
        %1149 = vmatprep.mubr.f32.mxu0 0.0
        %v1150 = vand.u32 %v836, 4294901760
        %v1151 = vsub.f32 %v836, %v1150
        %1152 = vmatmul.mubr.f32.gmra.mrb[0].mxu0 %v1151
        %v1153 = vpop.f32.mrb[0].mxu0
        %v1154 = vadd.f32 %v1054, %v1153
        %v1155 = vpop.f32.mrb[0].mxu0
        %1156 = vmatprep.mubr.f32.mxu0 0.0
        %v1157 = vand.u32 %v839, 4294901760
        %v1158 = vsub.f32 %v839, %v1157
        %1159 = vmatmul.mubr.f32.gmra.mrb[0].mxu0 %v1158
        %v1160 = vpop.f32.mrb[0].mxu0
        %v1161 = vadd.f32 %v1060, %v1160
        %v1162 = vpop.f32.mrb[0].mxu0
        %1163 = vmatprep.mubr.f32.mxu0 0.0
        %v1164 = vand.u32 %v842, 4294901760
        %v1165 = vsub.f32 %v842, %v1164
        %1166 = vmatmul.mubr.f32.gmra.mrb[0].mxu0 %v1165
        %v1167 = vpop.f32.mrb[0].mxu0
        %v1168 = vadd.f32 %v1066, %v1167
        %v1169 = vpop.f32.mrb[0].mxu0
        %1170 = vmatprep.mubr.f32.mxu0 0.0
        %v1171 = vand.u32 %v845, 4294901760
        %v1172 = vsub.f32 %v845, %v1171
        %1173 = vmatmul.mubr.f32.gmra.mrb[0].mxu0 %v1172
        %v1174 = vpop.f32.mrb[0].mxu0
        %v1175 = vadd.f32 %v1072, %v1174
        %v1176 = vpop.f32.mrb[0].mxu0
        %1177 = vdwg.mxu0
        %1178 = vmatprep.subr.mxu0 0.0
        %v1179 = vand.u32 %v822, 4294901760
        %1180 = vmatpush1.msra.mxu0 %v1179
        %1181 = vmatprep.subr.mxu0 0.0
        %v1182 = vand.u32 %v823, 4294901760
        %1183 = vmatpush1.msra.mxu0 %v1182
        %1184 = vmatprep.subr.mxu0 0.0
        %v1185 = vand.u32 %v824, 4294901760
        %1186 = vmatpush1.msra.mxu0 %v1185
        %1187 = vmatprep.subr.mxu0 0.0
        %v1188 = vand.u32 %v825, 4294901760
        %1189 = vmatpush1.msra.mxu0 %v1188
        %1190 = vmatprep.subr.mxu0 0.0
        %v1191 = vand.u32 %v849, 4294901760
        %1192 = vmatpush1.msra.mxu0 %v1191
        %1193 = vmatprep.subr.mxu0 0.0
        %1194 = vmatpush1.msra.mxu0 0.0
        %1195 = vmatprep.subr.mxu0 0.0
        %1196 = vmatpush1.msra.mxu0 0.0
        %1197 = vmatprep.subr.mxu0 0.0
        %1198 = vmatpush1.msra.mxu0 0.0
        %1199 = vmatprep.subr.mxu0 0.0
        %1200 = vmatpush1.msra.mxu0 0.0
        %1201 = vmatprep.subr.mxu0 0.0
        %1202 = vmatpush1.msra.mxu0 0.0
        %1203 = vmatprep.subr.mxu0 0.0
        %1204 = vmatpush1.msra.mxu0 0.0
        %1205 = vmatprep.subr.mxu0 0.0
        %1206 = vmatpush1.msra.mxu0 0.0
        %1207 = vmatprep.subr.mxu0 0.0
        %1208 = vmatpush1.msra.mxu0 0.0
        %1209 = vmatprep.subr.mxu0 0.0
        %1210 = vmatpush1.msra.mxu0 0.0
        %1211 = vmatprep.subr.mxu0 0.0
        %1212 = vmatpush1.msra.mxu0 0.0
        %1213 = vmatprep.subr.mxu0 0.0
        %1214 = vmatpush1.msra.mxu0 0.0
        %1215 = vmatprep.subr.mxu0 0.0
        %1216 = vmatpush1.msra.mxu0 0.0
        %1217 = vmatprep.subr.mxu0 0.0
        %1218 = vmatpush1.msra.mxu0 0.0
        %1219 = vmatprep.subr.mxu0 0.0
        %1220 = vmatpush1.msra.mxu0 0.0
        %1221 = vmatprep.subr.mxu0 0.0
        %1222 = vmatpush1.msra.mxu0 0.0
        %1223 = vmatprep.subr.mxu0 0.0
        %1224 = vmatpush1.msra.mxu0 0.0
        %1225 = vmatprep.subr.mxu0 0.0
        %1226 = vmatpush1.msra.mxu0 0.0
        %1227 = vmatprep.subr.mxu0 0.0
        %1228 = vmatpush1.msra.mxu0 0.0
        %1229 = vmatprep.subr.mxu0 0.0
        %1230 = vmatpush1.msra.mxu0 0.0
        %1231 = vmatprep.subr.mxu0 0.0
        %1232 = vmatpush1.msra.mxu0 0.0
        %1233 = vmatprep.subr.mxu0 0.0
        %1234 = vmatpush1.msra.mxu0 0.0
        %1235 = vmatprep.subr.mxu0 0.0
        %1236 = vmatpush1.msra.mxu0 0.0
        %1237 = vmatprep.subr.mxu0 0.0
        %1238 = vmatpush1.msra.mxu0 0.0
        %1239 = vmatprep.subr.mxu0 0.0
        %1240 = vmatpush1.msra.mxu0 0.0
        %1241 = vmatprep.subr.mxu0 0.0
        %1242 = vmatpush1.msra.mxu0 0.0
        %1243 = vmatprep.subr.mxu0 0.0
        %1244 = vmatpush1.msra.mxu0 0.0
        %1245 = vmatprep.subr.mxu0 0.0
        %1246 = vmatpush1.msra.mxu0 0.0
        %1247 = vmatprep.mubr.f32.mxu0 0.0
        %v1248 = vand.u32 %v836, 4294901760
        %v1249 = vsub.f32 %v836, %v1248
        %v1250 = vand.u32 %v1249, 4294901760
        %1251 = vmatmul.mubr.f32.gmra.mrb[0].mxu0 %v1250
        %v1252 = vpop.f32.mrb[0].mxu0
        %v1253 = vadd.f32 %v1154, %v1252
        %v1254 = vpop.f32.mrb[0].mxu0
        %1255 = vmatprep.mubr.f32.mxu0 0.0
        %v1256 = vand.u32 %v839, 4294901760
        %v1257 = vsub.f32 %v839, %v1256
        %v1258 = vand.u32 %v1257, 4294901760
        %1259 = vmatmul.mubr.f32.gmra.mrb[0].mxu0 %v1258
        %v1260 = vpop.f32.mrb[0].mxu0
        %v1261 = vadd.f32 %v1161, %v1260
        %v1262 = vpop.f32.mrb[0].mxu0
        %1263 = vmatprep.mubr.f32.mxu0 0.0
        %v1264 = vand.u32 %v842, 4294901760
        %v1265 = vsub.f32 %v842, %v1264
        %v1266 = vand.u32 %v1265, 4294901760
        %1267 = vmatmul.mubr.f32.gmra.mrb[0].mxu0 %v1266
        %v1268 = vpop.f32.mrb[0].mxu0
        %v1269 = vadd.f32 %v1168, %v1268
        %v1270 = vpop.f32.mrb[0].mxu0
        %1271 = vmatprep.mubr.f32.mxu0 0.0
        %v1272 = vand.u32 %v845, 4294901760
        %v1273 = vsub.f32 %v845, %v1272
        %v1274 = vand.u32 %v1273, 4294901760
        %1275 = vmatmul.mubr.f32.gmra.mrb[0].mxu0 %v1274
        %v1276 = vpop.f32.mrb[0].mxu0
        %v1277 = vadd.f32 %v1175, %v1276
        %v1278 = vpop.f32.mrb[0].mxu0
        %1279 = vdwg.mxu0
        %1280 = vmatprep.subr.mxu0 0.0
        %v1281 = vand.u32 %v822, 4294901760
        %v1282 = vsub.f32 %v822, %v1281
        %v1283 = vand.u32 %v1282, 4294901760
        %1284 = vmatpush1.msra.mxu0 %v1283
        %1285 = vmatprep.subr.mxu0 0.0
        %v1286 = vand.u32 %v823, 4294901760
        %v1287 = vsub.f32 %v823, %v1286
        %v1288 = vand.u32 %v1287, 4294901760
        %1289 = vmatpush1.msra.mxu0 %v1288
        %1290 = vmatprep.subr.mxu0 0.0
        %v1291 = vand.u32 %v824, 4294901760
        %v1292 = vsub.f32 %v824, %v1291
        %v1293 = vand.u32 %v1292, 4294901760
        %1294 = vmatpush1.msra.mxu0 %v1293
        %1295 = vmatprep.subr.mxu0 0.0
        %v1296 = vand.u32 %v825, 4294901760
        %v1297 = vsub.f32 %v825, %v1296
        %v1298 = vand.u32 %v1297, 4294901760
        %1299 = vmatpush1.msra.mxu0 %v1298
        %1300 = vmatprep.subr.mxu0 0.0
        %v1301 = vand.u32 %v849, 4294901760
        %v1302 = vsub.f32 %v849, %v1301
        %v1303 = vand.u32 %v1302, 4294901760
        %1304 = vmatpush1.msra.mxu0 %v1303
        %1305 = vmatprep.subr.mxu0 0.0
        %1306 = vmatpush1.msra.mxu0 0.0
        %1307 = vmatprep.subr.mxu0 0.0
        %1308 = vmatpush1.msra.mxu0 0.0
        %1309 = vmatprep.subr.mxu0 0.0
        %1310 = vmatpush1.msra.mxu0 0.0
        %1311 = vmatprep.subr.mxu0 0.0
        %1312 = vmatpush1.msra.mxu0 0.0
        %1313 = vmatprep.subr.mxu0 0.0
        %1314 = vmatpush1.msra.mxu0 0.0
        %1315 = vmatprep.subr.mxu0 0.0
        %1316 = vmatpush1.msra.mxu0 0.0
        %1317 = vmatprep.subr.mxu0 0.0
        %1318 = vmatpush1.msra.mxu0 0.0
        %1319 = vmatprep.subr.mxu0 0.0
        %1320 = vmatpush1.msra.mxu0 0.0
        %1321 = vmatprep.subr.mxu0 0.0
        %1322 = vmatpush1.msra.mxu0 0.0
        %1323 = vmatprep.subr.mxu0 0.0
        %1324 = vmatpush1.msra.mxu0 0.0
        %1325 = vmatprep.subr.mxu0 0.0
        %1326 = vmatpush1.msra.mxu0 0.0
        %1327 = vmatprep.subr.mxu0 0.0
        %1328 = vmatpush1.msra.mxu0 0.0
        %1329 = vmatprep.subr.mxu0 0.0
        %1330 = vmatpush1.msra.mxu0 0.0
        %1331 = vmatprep.subr.mxu0 0.0
        %1332 = vmatpush1.msra.mxu0 0.0
        %1333 = vmatprep.subr.mxu0 0.0
        %1334 = vmatpush1.msra.mxu0 0.0
        %1335 = vmatprep.subr.mxu0 0.0
        %1336 = vmatpush1.msra.mxu0 0.0
        %1337 = vmatprep.subr.mxu0 0.0
        %1338 = vmatpush1.msra.mxu0 0.0
        %1339 = vmatprep.subr.mxu0 0.0
        %1340 = vmatpush1.msra.mxu0 0.0
        %1341 = vmatprep.subr.mxu0 0.0
        %1342 = vmatpush1.msra.mxu0 0.0
        %1343 = vmatprep.subr.mxu0 0.0
        %1344 = vmatpush1.msra.mxu0 0.0
        %1345 = vmatprep.subr.mxu0 0.0
        %1346 = vmatpush1.msra.mxu0 0.0
        %1347 = vmatprep.subr.mxu0 0.0
        %1348 = vmatpush1.msra.mxu0 0.0
        %1349 = vmatprep.subr.mxu0 0.0
        %1350 = vmatpush1.msra.mxu0 0.0
        %1351 = vmatprep.subr.mxu0 0.0
        %1352 = vmatpush1.msra.mxu0 0.0
        %1353 = vmatprep.subr.mxu0 0.0
        %1354 = vmatpush1.msra.mxu0 0.0
        %1355 = vmatprep.subr.mxu0 0.0
        %1356 = vmatpush1.msra.mxu0 0.0
        %1357 = vmatprep.subr.mxu0 0.0
        %1358 = vmatpush1.msra.mxu0 0.0
        %1359 = vmatprep.mubr.f32.mxu0 0.0
        %v1360 = vand.u32 %v836, 4294901760
        %1361 = vmatmul.mubr.f32.gmra.mrb[0].mxu0 %v1360
        %v1362 = vpop.f32.mrb[0].mxu0
        %v1363 = vadd.f32 %v1253, %v1362
        %v1364 = vpop.f32.mrb[0].mxu0
        %1365 = vmatprep.mubr.f32.mxu0 0.0
        %v1366 = vand.u32 %v839, 4294901760
        %1367 = vmatmul.mubr.f32.gmra.mrb[0].mxu0 %v1366
        %v1368 = vpop.f32.mrb[0].mxu0
        %v1369 = vadd.f32 %v1261, %v1368
        %v1370 = vpop.f32.mrb[0].mxu0
        %1371 = vmatprep.mubr.f32.mxu0 0.0
        %v1372 = vand.u32 %v842, 4294901760
        %1373 = vmatmul.mubr.f32.gmra.mrb[0].mxu0 %v1372
        %v1374 = vpop.f32.mrb[0].mxu0
        %v1375 = vadd.f32 %v1269, %v1374
        %v1376 = vpop.f32.mrb[0].mxu0
        %1377 = vmatprep.mubr.f32.mxu0 0.0
        %v1378 = vand.u32 %v845, 4294901760
        %1379 = vmatmul.mubr.f32.gmra.mrb[0].mxu0 %v1378
        %v1380 = vpop.f32.mrb[0].mxu0
        %v1381 = vadd.f32 %v1277, %v1380
        %v1382 = vpop.f32.mrb[0].mxu0
        %1383 = vdwg.mxu0
        %1384 = vmatprep.subr.mxu0 0.0
        %v1385 = vand.u32 %v822, 4294901760
        %1386 = vmatpush1.msra.mxu0 %v1385
        %1387 = vmatprep.subr.mxu0 0.0
        %v1388 = vand.u32 %v823, 4294901760
        %1389 = vmatpush1.msra.mxu0 %v1388
        %1390 = vmatprep.subr.mxu0 0.0
        %v1391 = vand.u32 %v824, 4294901760
        %1392 = vmatpush1.msra.mxu0 %v1391
        %1393 = vmatprep.subr.mxu0 0.0
        %v1394 = vand.u32 %v825, 4294901760
        %1395 = vmatpush1.msra.mxu0 %v1394
        %1396 = vmatprep.subr.mxu0 0.0
        %v1397 = vand.u32 %v849, 4294901760
        %1398 = vmatpush1.msra.mxu0 %v1397
        %1399 = vmatprep.subr.mxu0 0.0
        %1400 = vmatpush1.msra.mxu0 0.0
        %1401 = vmatprep.subr.mxu0 0.0
        %1402 = vmatpush1.msra.mxu0 0.0
        %1403 = vmatprep.subr.mxu0 0.0
        %1404 = vmatpush1.msra.mxu0 0.0
        %1405 = vmatprep.subr.mxu0 0.0
        %1406 = vmatpush1.msra.mxu0 0.0
        %1407 = vmatprep.subr.mxu0 0.0
        %1408 = vmatpush1.msra.mxu0 0.0
        %1409 = vmatprep.subr.mxu0 0.0
        %1410 = vmatpush1.msra.mxu0 0.0
        %1411 = vmatprep.subr.mxu0 0.0
        %1412 = vmatpush1.msra.mxu0 0.0
        %1413 = vmatprep.subr.mxu0 0.0
        %1414 = vmatpush1.msra.mxu0 0.0
        %1415 = vmatprep.subr.mxu0 0.0
        %1416 = vmatpush1.msra.mxu0 0.0
        %1417 = vmatprep.subr.mxu0 0.0
        %1418 = vmatpush1.msra.mxu0 0.0
        %1419 = vmatprep.subr.mxu0 0.0
        %1420 = vmatpush1.msra.mxu0 0.0
        %1421 = vmatprep.subr.mxu0 0.0
        %1422 = vmatpush1.msra.mxu0 0.0
        %1423 = vmatprep.subr.mxu0 0.0
        %1424 = vmatpush1.msra.mxu0 0.0
        %1425 = vmatprep.subr.mxu0 0.0
        %1426 = vmatpush1.msra.mxu0 0.0
        %1427 = vmatprep.subr.mxu0 0.0
        %1428 = vmatpush1.msra.mxu0 0.0
        %1429 = vmatprep.subr.mxu0 0.0
        %1430 = vmatpush1.msra.mxu0 0.0
        %1431 = vmatprep.subr.mxu0 0.0
        %1432 = vmatpush1.msra.mxu0 0.0
        %1433 = vmatprep.subr.mxu0 0.0
        %1434 = vmatpush1.msra.mxu0 0.0
        %1435 = vmatprep.subr.mxu0 0.0
        %1436 = vmatpush1.msra.mxu0 0.0
        %1437 = vmatprep.subr.mxu0 0.0
        %1438 = vmatpush1.msra.mxu0 0.0
        %1439 = vmatprep.subr.mxu0 0.0
        %1440 = vmatpush1.msra.mxu0 0.0
        %1441 = vmatprep.subr.mxu0 0.0
        %1442 = vmatpush1.msra.mxu0 0.0
        %1443 = vmatprep.subr.mxu0 0.0
        %1444 = vmatpush1.msra.mxu0 0.0
        %1445 = vmatprep.subr.mxu0 0.0
        %1446 = vmatpush1.msra.mxu0 0.0
        %1447 = vmatprep.subr.mxu0 0.0
        %1448 = vmatpush1.msra.mxu0 0.0
        %1449 = vmatprep.subr.mxu0 0.0
        %1450 = vmatpush1.msra.mxu0 0.0
        %1451 = vmatprep.subr.mxu0 0.0
        %1452 = vmatpush1.msra.mxu0 0.0
        %1453 = vmatprep.mubr.f32.mxu0 0.0
        %v1454 = vand.u32 %v836, 4294901760
        %1455 = vmatmul.mubr.f32.gmra.mrb[0].mxu0 %v1454
        %v1456 = vpop.f32.mrb[0].mxu0
        %v1457 = vadd.f32 %v1363, %v1456
        %v1458 = vpop.f32.mrb[0].mxu0
        %1459 = vmatprep.mubr.f32.mxu0 0.0
        %v1460 = vand.u32 %v839, 4294901760
        %1461 = vmatmul.mubr.f32.gmra.mrb[0].mxu0 %v1460
        %v1462 = vpop.f32.mrb[0].mxu0
        %v1463 = vadd.f32 %v1369, %v1462
        %v1464 = vpop.f32.mrb[0].mxu0
        %1465 = vmatprep.mubr.f32.mxu0 0.0
        %v1466 = vand.u32 %v842, 4294901760
        %1467 = vmatmul.mubr.f32.gmra.mrb[0].mxu0 %v1466
        %v1468 = vpop.f32.mrb[0].mxu0
        %v1469 = vadd.f32 %v1375, %v1468
        %v1470 = vpop.f32.mrb[0].mxu0
        %1471 = vmatprep.mubr.f32.mxu0 0.0
        %v1472 = vand.u32 %v845, 4294901760
        %1473 = vmatmul.mubr.f32.gmra.mrb[0].mxu0 %v1472
        %v1474 = vpop.f32.mrb[0].mxu0
        %v1475 = vadd.f32 %v1381, %v1474
        %v1476 = vpop.f32.mrb[0].mxu0
        %1477 = vdwg.mxu0
        %1478 = vst.msk [vmem:[%s621] sm:$0xff] %vm627, %v1457
        %1479 = vst.msk [vmem:[%s621 + $0x8] sm:$0xff] %vm627, %v1463
        %1480 = vst.msk [vmem:[%s621 + $0x10] sm:$0xff] %vm627, %v1469
        %1481 = vst.msk [vmem:[%s621 + $0x18] sm:$0xff] %vm627, %v1475
        %s1482 = smul.u32 4, %s21
        %p1483 = scmp.lt.s32.totalorder %s20, 1
        %s1484 = scalar_select %p1483, %s20, 1
        %p1485 = scmp.lt.s32.totalorder %s1482, 7
        %s1486 = scalar_select %p1485, %s1482, 7
        %s1487 = smul.addr %s1484, 8
        %s1488 = sadd.s32 %s1486, %s1487
        %s1489 = smul.addr %s1488, 8
        %s1490 = scalar_lea.vmem %s5, %s1489
        // Predicated region
        $region145: #{tpu_custom_call.1} parent=135 // pred_check
          %p1491 = pneg %p178
        $region146: #{tpu_custom_call.1} parent=135 // pred_check_branch
          %1493 = sbr.rel (%p1491) target = $region148
        $region147: #{tpu_custom_call.1} parent=135 // pred_region
          %s1494 = smul.u32 4, %s21
        $region148: #{tpu_custom_call.1} parent=135 // pred_fallthru
          _
      $region136: #{tpu_custom_call.1} parent=5 // pred_fallthru
        _
      %p1495 = scmp.le.s32.totalorder 2, %s11
      // Predicated region
      $region149: #{tpu_custom_call.1} parent=5 // pred_check
        %p1496 = pneg %p1495
      $region150: #{tpu_custom_call.1} parent=5 // pred_check_branch
        %1498 = sbr.rel (%p1496) target = $region152
      $region151: #{tpu_custom_call.1} parent=5 // pred_region
        %s1499 = ssub.s32 %s11, 2
        // Predicated region
        $region153: #{tpu_custom_call.1} parent=151 // pred_check
          %p1500 = pneg %p184
        $region154: #{tpu_custom_call.1} parent=151 // pred_check_branch
          %1502 = sbr.rel (%p1500) target = $region156
        $region155: #{tpu_custom_call.1} parent=151 // pred_region
          %s1503 = smul.u32 4, %s23
          %p1504 = scmp.lt.s32.totalorder %s22, 1
          %s1505 = scalar_select %p1504, %s22, 1
          %p1506 = scmp.lt.s32.totalorder %s1503, 7
          %s1507 = scalar_select %p1506, %s1503, 7
          %s1508 = smul.addr %s1505, 8
          %s1509 = sadd.s32 %s1507, %s1508
          %s1510 = smul.addr %s1509, 8
          %s1511 = scalar_lea.vmem %s5, %s1510
        $region156: #{tpu_custom_call.1} parent=151 // pred_fallthru
          _
      $region152: #{tpu_custom_call.1} parent=5 // pred_fallthru
        _
    $region6: #{tpu_custom_call.1} parent=1 // loop_footer
      %s15 = sadd.s32 1, %s11
    $region7: #{tpu_custom_call.1} parent=1 // loop_footer_branch
      %10 = sbr.rel target = $region3
    $region8: #{tpu_custom_call.1} parent=1 // loop_exit
      _

</llo_original>
